<compile_context>
chip_gen: v5e
topology: v5e:2x2
jax: 0.10.0
libtpu: 0.0.40
codegen_flags: <defaults>
</compile_context>

<pallas_src>
import jax
import jax.numpy as jnp
from jax.experimental import pallas as pl
from jax.experimental.pallas import tpu as pltpu

Z_SIZE = 128
H1 = 256
H2 = 512
IMG_SIZE = 784


def _leaky_relu(x, slope=0.2):
    # Single vmax per element instead of compare + select.
    return jnp.maximum(x, slope * x)


def generator_kernel(x_ref, w1_ref, b1_ref, w2_ref, b2_ref, w3_ref, b3_ref,
                     o_ref):
    # fc1: [TM, 128] @ [128, 256] (bf16 operands, f32 accumulate) + bias, LeakyReLU
    h1 = jnp.dot(x_ref[...], w1_ref[...],
                 preferred_element_type=jnp.float32) + b1_ref[...]
    h1 = _leaky_relu(h1)
    # fc2: [TM, 256] @ [256, 512] + bias, LeakyReLU
    h2 = jnp.dot(h1.astype(jnp.bfloat16), w2_ref[...],
                 preferred_element_type=jnp.float32) + b2_ref[...]
    h2 = _leaky_relu(h2)
    # fc3: [TM, 512] @ [512, 784] + bias, Tanh (EUP)
    h3 = jnp.dot(h2.astype(jnp.bfloat16), w3_ref[...],
                 preferred_element_type=jnp.float32) + b3_ref[...]
    o_ref[...] = jnp.tanh(h3).astype(o_ref.dtype)


def _round_up(n, m):
    return ((n + m - 1) // m) * m


def generator_forward(x, params, *, tm=256):
    """x: [B, 128].  params: f32 (w: [in, out], b: [1, out]); weights run as bf16."""
    w1, b1, w2, b2, w3, b3 = params
    B = x.shape[0]

    # Batch tile: sublane granularity (8) at minimum, `tm` (=256) at maximum.
    tm = min(tm, _round_up(B, 8))
    b_pad = _round_up(B, tm)

    xb = x.astype(jnp.bfloat16)
    if b_pad != B:
        xb = jnp.pad(xb, ((0, b_pad - B), (0, 0)))

    # bf16 weights; biases stay f32 (added after the f32-accumulated matmul).
    w1b, w2b, w3b = (w.astype(jnp.bfloat16) for w in (w1, w2, w3))

    grid = (b_pad // tm,)

    # Weights / biases: constant block index -> resident in VMEM across all
    # batch-grid steps. x / out: tiled over the batch axis, auto-pipelined.
    def full(shape):
        return pl.BlockSpec(shape, lambda i: (0, 0))

    out = pl.pallas_call(
        generator_kernel,
        out_shape=jax.ShapeDtypeStruct((b_pad, IMG_SIZE), jnp.float32),
        grid=grid,
        in_specs=[
            pl.BlockSpec((tm, Z_SIZE), lambda i: (i, 0)),
            full((Z_SIZE, H1)), full((1, H1)),
            full((H1, H2)), full((1, H2)),
            full((H2, IMG_SIZE)), full((1, IMG_SIZE)),
        ],
        out_specs=pl.BlockSpec((tm, IMG_SIZE), lambda i: (i, 0)),
        compiler_params=pltpu.CompilerParams(
            dimension_semantics=("parallel",),   # shard batch tiles across TCs (v7x)
            vmem_limit_bytes=64 * 1024 * 1024,
        ),
    )(xb, w1b, b1, w2b, b2, w3b, b3)

    return out[:B]


def init_params(key):
    """Deterministic init mimicking PyTorch nn.Linear default U(-1/sqrt(fan_in), 1/sqrt(fan_in))."""
    ks = jax.random.split(key, 6)

    def lin(kw, kb, fan_in, fan_out):
        bound = 1.0 / jnp.sqrt(fan_in)
        w = jax.random.uniform(kw, (fan_in, fan_out), jnp.float32, -bound, bound)
        b = jax.random.uniform(kb, (1, fan_out), jnp.float32, -bound, bound)
        return w, b

    w1, b1 = lin(ks[0], ks[1], Z_SIZE, H1)
    w2, b2 = lin(ks[2], ks[3], H1, H2)
    w3, b3 = lin(ks[4], ks[5], H2, IMG_SIZE)
    return (w1, b1, w2, b2, w3, b3)


def reference_forward(x, params):
    """Pure-f32 reference of the Generator forward."""
    w1, b1, w2, b2, w3, b3 = params
    h = x @ w1 + b1
    h = jnp.maximum(h, 0.2 * h)
    h = h @ w2 + b2
    h = jnp.maximum(h, 0.2 * h)
    return jnp.tanh(h @ w3 + b3)


if __name__ == "__main__":
    key = jax.random.PRNGKey(0)
    k_params, k_z = jax.random.split(key)
    params = init_params(k_params)

    B = 8  # small demo batch (kernel supports arbitrary B via batch tiling)
    z = jax.random.normal(k_z, (B, Z_SIZE), jnp.float32)

    out = jax.block_until_ready(generator_forward(z, params))

    ref = reference_forward(z, params)
    assert out.shape == (B, IMG_SIZE)
    # bf16 weights/activations vs. f32 reference: loosened absolute tolerance
    # (outputs are tanh-bounded in [-1, 1]).
    assert jnp.allclose(out, ref, atol=3e-2, rtol=0.0), \
        float(jnp.max(jnp.abs(out - ref)))

    print("KERNEL_OK")
</pallas_src>

<mosaic_0001>
module attributes {stable_mosaic.version = 11 : i64} {
  func.func @generator_kernel(%arg0: i32, %arg1: memref<8x128xbf16, #tpu.memory_space<vmem>>, %arg2: memref<128x256xbf16, #tpu.memory_space<vmem>>, %arg3: memref<1x256xf32, #tpu.memory_space<vmem>>, %arg4: memref<256x512xbf16, #tpu.memory_space<vmem>>, %arg5: memref<1x512xf32, #tpu.memory_space<vmem>>, %arg6: memref<512x784xbf16, #tpu.memory_space<vmem>>, %arg7: memref<1x784xf32, #tpu.memory_space<vmem>>, %arg8: memref<8x784xf32, #tpu.memory_space<vmem>>) attributes {dimension_semantics = [#tpu.dimension_semantics<parallel>], iteration_bounds = array<i64: 1>, scalar_prefetch = 0 : i64, scratch_operands = 0 : i64, tpu.core_type = #tpu.core_type<tc>, window_params = [{transform_indices = @transform_0, window_bounds = array<i64: 8, 128>}, {pipeline_mode = #tpu.pipeline_mode<synchronous>, transform_indices = @transform_1, window_bounds = array<i64: 128, 256>}, {pipeline_mode = #tpu.pipeline_mode<synchronous>, transform_indices = @transform_2, window_bounds = array<i64: 1, 256>}, {pipeline_mode = #tpu.pipeline_mode<synchronous>, transform_indices = @transform_3, window_bounds = array<i64: 256, 512>}, {pipeline_mode = #tpu.pipeline_mode<synchronous>, transform_indices = @transform_4, window_bounds = array<i64: 1, 512>}, {pipeline_mode = #tpu.pipeline_mode<synchronous>, transform_indices = @transform_5, window_bounds = array<i64: 512, 784>}, {pipeline_mode = #tpu.pipeline_mode<synchronous>, transform_indices = @transform_6, window_bounds = array<i64: 1, 784>}, {transform_indices = @transform_7, window_bounds = array<i64: 8, 784>}]} {
    %c0 = arith.constant 0 : index
    %c0_0 = arith.constant 0 : index
    %0 = vector.load %arg1[%c0, %c0_0] : memref<8x128xbf16, #tpu.memory_space<vmem>>, vector<8x128xbf16>
    %c0_1 = arith.constant 0 : index
    %c0_2 = arith.constant 0 : index
    %1 = vector.load %arg2[%c0_1, %c0_2] : memref<128x256xbf16, #tpu.memory_space<vmem>>, vector<128x256xbf16>
    %cst = arith.constant dense<0.000000e+00> : vector<8x256xf32>
    %2 = tpu.matmul %0, %1, %cst {dimension_numbers = #tpu.dot_dimension_numbers<[1], [0], [0], [1], [0, 0, 1, 1], [], []>} : vector<8x128xbf16>, vector<128x256xbf16>, vector<8x256xf32> -> vector<8x256xf32>
    %c0_3 = arith.constant 0 : index
    %c0_4 = arith.constant 0 : index
    %3 = vector.load %arg3[%c0_3, %c0_4] : memref<1x256xf32, #tpu.memory_space<vmem>>, vector<1x256xf32>
    %4 = vector.broadcast %3 : vector<1x256xf32> to vector<8x256xf32>
    %5 = arith.addf %2, %4 : vector<8x256xf32>
    %cst_5 = arith.constant 2.000000e-01 : f32
    %6 = vector.broadcast %cst_5 : f32 to vector<8x256xf32>
    %7 = arith.mulf %6, %5 : vector<8x256xf32>
    %8 = arith.maximumf %5, %7 : vector<8x256xf32>
    %9 = arith.truncf %8 : vector<8x256xf32> to vector<8x256xbf16>
    %c0_6 = arith.constant 0 : index
    %c0_7 = arith.constant 0 : index
    %10 = vector.load %arg4[%c0_6, %c0_7] : memref<256x512xbf16, #tpu.memory_space<vmem>>, vector<256x512xbf16>
    %cst_8 = arith.constant dense<0.000000e+00> : vector<8x512xf32>
    %11 = tpu.matmul %9, %10, %cst_8 {dimension_numbers = #tpu.dot_dimension_numbers<[1], [0], [0], [1], [0, 0, 1, 1], [], []>} : vector<8x256xbf16>, vector<256x512xbf16>, vector<8x512xf32> -> vector<8x512xf32>
    %c0_9 = arith.constant 0 : index
    %c0_10 = arith.constant 0 : index
    %12 = vector.load %arg5[%c0_9, %c0_10] : memref<1x512xf32, #tpu.memory_space<vmem>>, vector<1x512xf32>
    %13 = vector.broadcast %12 : vector<1x512xf32> to vector<8x512xf32>
    %14 = arith.addf %11, %13 : vector<8x512xf32>
    %cst_11 = arith.constant 2.000000e-01 : f32
    %15 = vector.broadcast %cst_11 : f32 to vector<8x512xf32>
    %16 = arith.mulf %15, %14 : vector<8x512xf32>
    %17 = arith.maximumf %14, %16 : vector<8x512xf32>
    %18 = arith.truncf %17 : vector<8x512xf32> to vector<8x512xbf16>
    %c0_12 = arith.constant 0 : index
    %c0_13 = arith.constant 0 : index
    %19 = vector.load %arg6[%c0_12, %c0_13] : memref<512x784xbf16, #tpu.memory_space<vmem>>, vector<512x784xbf16>
    %cst_14 = arith.constant dense<0.000000e+00> : vector<8x784xf32>
    %20 = tpu.matmul %18, %19, %cst_14 {dimension_numbers = #tpu.dot_dimension_numbers<[1], [0], [0], [1], [0, 0, 1, 1], [], []>} : vector<8x512xbf16>, vector<512x784xbf16>, vector<8x784xf32> -> vector<8x784xf32>
    %c0_15 = arith.constant 0 : index
    %c0_16 = arith.constant 0 : index
    %21 = vector.load %arg7[%c0_15, %c0_16] : memref<1x784xf32, #tpu.memory_space<vmem>>, vector<1x784xf32>
    %22 = vector.broadcast %21 : vector<1x784xf32> to vector<8x784xf32>
    %23 = arith.addf %20, %22 : vector<8x784xf32>
    %24 = math.tanh %23 : vector<8x784xf32>
    %c0_17 = arith.constant 0 : index
    %c0_18 = arith.constant 0 : index
    %25 = vector.load %arg8[%c0_17, %c0_18] : memref<8x784xf32, #tpu.memory_space<vmem>>, vector<8x784xf32>
    tpu.vector_store %arg8[%c0_17, %c0_18], %24 {strides = array<i32>} : memref<8x784xf32, #tpu.memory_space<vmem>>, vector<8x784xf32>,
    return
  }
  func.func @transform_0(%arg0: i32) -> (i32, i32) {
    %c0_i32 = arith.constant 0 : i32
    %c0_i32_0 = arith.constant 0 : i32
    return %arg0, %c0_i32 : i32, i32
  }
  func.func @transform_1(%arg0: i32) -> (i32, i32) {
    %c0_i32 = arith.constant 0 : i32
    %c0_i32_0 = arith.constant 0 : i32
    %c0_i32_1 = arith.constant 0 : i32
    return %c0_i32, %c0_i32_0 : i32, i32
  }
  func.func @transform_2(%arg0: i32) -> (i32, i32) {
    %c0_i32 = arith.constant 0 : i32
    %c0_i32_0 = arith.constant 0 : i32
    %c0_i32_1 = arith.constant 0 : i32
    return %c0_i32, %c0_i32_0 : i32, i32
  }
  func.func @transform_3(%arg0: i32) -> (i32, i32) {
    %c0_i32 = arith.constant 0 : i32
    %c0_i32_0 = arith.constant 0 : i32
    %c0_i32_1 = arith.constant 0 : i32
    return %c0_i32, %c0_i32_0 : i32, i32
  }
  func.func @transform_4(%arg0: i32) -> (i32, i32) {
    %c0_i32 = arith.constant 0 : i32
    %c0_i32_0 = arith.constant 0 : i32
    %c0_i32_1 = arith.constant 0 : i32
    return %c0_i32, %c0_i32_0 : i32, i32
  }
  func.func @transform_5(%arg0: i32) -> (i32, i32) {
    %c0_i32 = arith.constant 0 : i32
    %c0_i32_0 = arith.constant 0 : i32
    %c0_i32_1 = arith.constant 0 : i32
    return %c0_i32, %c0_i32_0 : i32, i32
  }
  func.func @transform_6(%arg0: i32) -> (i32, i32) {
    %c0_i32 = arith.constant 0 : i32
    %c0_i32_0 = arith.constant 0 : i32
    %c0_i32_1 = arith.constant 0 : i32
    return %c0_i32, %c0_i32_0 : i32, i32
  }
  func.func @transform_7(%arg0: i32) -> (i32, i32) {
    %c0_i32 = arith.constant 0 : i32
    %c0_i32_0 = arith.constant 0 : i32
    return %arg0, %c0_i32 : i32, i32
  }
}

</mosaic_0001>

<llo_original>
// kernel: tpu_custom_call.1
$region0: #{tpu_custom_call.1}
  #allocation0 [shape = 'u32[]', space=smem, size = 0x4, offset = 0x4, fixed_abs, tag = 'smem constant byte address 0x4 - core index']
  #allocation1 [shape = 'u32[72,128]{1,0:T(1,128)}', space=vmem, size = 0x9000, scoped, tag = 'internal scratch']
  %s0 = inlined_call_operand.vmem [shape: bf16[8,128], index: 0, kind: input, shape index: {}]
  %s1 = inlined_call_operand.vmem [shape: bf16[128,256], index: 1, kind: input, shape index: {}]
  %s2 = inlined_call_operand.vmem [shape: f32[1,256], index: 2, kind: input, shape index: {}]
  %s3 = inlined_call_operand.vmem [shape: bf16[256,512], index: 3, kind: input, shape index: {}]
  %s4 = inlined_call_operand.vmem [shape: f32[1,512], index: 4, kind: input, shape index: {}]
  %s5 = inlined_call_operand.vmem [shape: bf16[512,784], index: 5, kind: input, shape index: {}]
  %s6 = inlined_call_operand.vmem [shape: f32[1,784], index: 6, kind: input, shape index: {}]
  %s7 = inlined_call_operand.hbm [shape: f32[8,784], index: 7, kind: output, shape index: {}]
  %s8 = sld [smem:[#allocation0]]
  $region38: #{tpu_custom_call.1} parent=0
    _
  %s10 = ssub.s32 1, %s8
  %s11 = scalar_select 0, %s10, %s8
  $region1: #{tpu_custom_call.1} parent=0
    #allocation2 [shape = 'u8[28672]{0}', space=vmem, size = 0x7000, scoped, tag = 'output window, operand 0, single buffered']
    #allocation3 [shape = 's32[1]{0}', space=sflag, size = 0x4, scoped, tag = 'scoped memory for tpu_custom_call.1']
    %12 = vsyncpa [#allocation3], 0
    // Predicated region
    $region2: #{tpu_custom_call.1} parent=1 // pred_check
      _
    $region3: #{tpu_custom_call.1} parent=1 // pred_check_branch
      %14 = sbr.rel (0) target = $region5
    $region4: #{tpu_custom_call.1} parent=1 // pred_region
      _
    $region5: #{tpu_custom_call.1} parent=1 // pred_fallthru
      _
    // Predicated region
    $region6: #{tpu_custom_call.1} parent=1 // pred_check
      _
    $region7: #{tpu_custom_call.1} parent=1 // pred_check_branch
      %16 = sbr.rel (0) target = $region9
    $region8: #{tpu_custom_call.1} parent=1 // pred_region
      _
    $region9: #{tpu_custom_call.1} parent=1 // pred_fallthru
      _
    // Predicated region
    $region10: #{tpu_custom_call.1} parent=1 // pred_check
      _
    $region11: #{tpu_custom_call.1} parent=1 // pred_check_branch
      %18 = sbr.rel (0) target = $region13
    $region12: #{tpu_custom_call.1} parent=1 // pred_region
      _
    $region13: #{tpu_custom_call.1} parent=1 // pred_fallthru
      _
    // Predicated region
    $region14: #{tpu_custom_call.1} parent=1 // pred_check
      _
    $region15: #{tpu_custom_call.1} parent=1 // pred_check_branch
      %20 = sbr.rel (0) target = $region17
    $region16: #{tpu_custom_call.1} parent=1 // pred_region
      _
    $region17: #{tpu_custom_call.1} parent=1 // pred_fallthru
      _
    // Predicated region
    $region18: #{tpu_custom_call.1} parent=1 // pred_check
      _
    $region19: #{tpu_custom_call.1} parent=1 // pred_check_branch
      %22 = sbr.rel (0) target = $region21
    $region20: #{tpu_custom_call.1} parent=1 // pred_region
      _
    $region21: #{tpu_custom_call.1} parent=1 // pred_fallthru
      _
    // Predicated region
    $region22: #{tpu_custom_call.1} parent=1 // pred_check
      _
    $region23: #{tpu_custom_call.1} parent=1 // pred_check_branch
      %24 = sbr.rel (0) target = $region25
    $region24: #{tpu_custom_call.1} parent=1 // pred_region
      _
    $region25: #{tpu_custom_call.1} parent=1 // pred_fallthru
      _
    // Predicated region
    $region26: #{tpu_custom_call.1} parent=1 // pred_check
      _
    $region27: #{tpu_custom_call.1} parent=1 // pred_check_branch
      %26 = sbr.rel (0) target = $region29
    $region28: #{tpu_custom_call.1} parent=1 // pred_region
      _
    $region29: #{tpu_custom_call.1} parent=1 // pred_fallthru
      _
    %v27 = vld [vmem:[%s0] sm:$0xf]
    %v28 = vld [vmem:[%s1] sm:$0xff]
    %v29 = vld [vmem:[%s1 + $0x8] sm:$0xff]
    %v30 = vld [vmem:[%s1 + $0x10] sm:$0xff]
    %v31 = vld [vmem:[%s1 + $0x18] sm:$0xff]
    %v32 = vld [vmem:[%s1 + $0x20] sm:$0xff]
    %v33 = vld [vmem:[%s1 + $0x28] sm:$0xff]
    %v34 = vld [vmem:[%s1 + $0x30] sm:$0xff]
    %v35 = vld [vmem:[%s1 + $0x38] sm:$0xff]
    %v36 = vld [vmem:[%s1 + $0x40] sm:$0xff]
    %v37 = vld [vmem:[%s1 + $0x48] sm:$0xff]
    %v38 = vld [vmem:[%s1 + $0x50] sm:$0xff]
    %v39 = vld [vmem:[%s1 + $0x58] sm:$0xff]
    %v40 = vld [vmem:[%s1 + $0x60] sm:$0xff]
    %v41 = vld [vmem:[%s1 + $0x68] sm:$0xff]
    %v42 = vld [vmem:[%s1 + $0x70] sm:$0xff]
    %v43 = vld [vmem:[%s1 + $0x78] sm:$0xff]
    %v44 = vld [vmem:[%s2] sm:$0x3]
    %v46 = vperm.slane %v44, 0
    %v47 = vperm.slane %v44, 1
    %v66 = vunpack.c.l.b16 %v28
    %v67 = vunpack.c.h.b16 %v28
    %v68 = vunpack.c.l.b16 %v29
    %v69 = vunpack.c.h.b16 %v29
    %v70 = vunpack.c.l.b16 %v30
    %v71 = vunpack.c.h.b16 %v30
    %v72 = vunpack.c.l.b16 %v31
    %v73 = vunpack.c.h.b16 %v31
    %v74 = vunpack.c.l.b16 %v32
    %v75 = vunpack.c.h.b16 %v32
    %v76 = vunpack.c.l.b16 %v33
    %v77 = vunpack.c.h.b16 %v33
    %v78 = vunpack.c.l.b16 %v34
    %v79 = vunpack.c.h.b16 %v34
    %v80 = vunpack.c.l.b16 %v35
    %v81 = vunpack.c.h.b16 %v35
    %v82 = vunpack.c.l.b16 %v36
    %v83 = vunpack.c.h.b16 %v36
    %v84 = vunpack.c.l.b16 %v37
    %v85 = vunpack.c.h.b16 %v37
    %v86 = vunpack.c.l.b16 %v38
    %v87 = vunpack.c.h.b16 %v38
    %v88 = vunpack.c.l.b16 %v39
    %v89 = vunpack.c.h.b16 %v39
    %v90 = vunpack.c.l.b16 %v40
    %v91 = vunpack.c.h.b16 %v40
    %v92 = vunpack.c.l.b16 %v41
    %v93 = vunpack.c.h.b16 %v41
    %v94 = vunpack.c.l.b16 %v42
    %v95 = vunpack.c.h.b16 %v42
    %v96 = vunpack.c.l.b16 %v43
    %v97 = vunpack.c.h.b16 %v43
    %v98 = vpack.c.b16 %v68, %v66
    %v99 = vpack.c.b16 %v69, %v67
    %v100 = vpack.c.b16 %v72, %v70
    %v101 = vpack.c.b16 %v73, %v71
    %v102 = vpack.c.b16 %v76, %v74
    %v103 = vpack.c.b16 %v77, %v75
    %v104 = vpack.c.b16 %v80, %v78
    %v105 = vpack.c.b16 %v81, %v79
    %v106 = vpack.c.b16 %v84, %v82
    %v107 = vpack.c.b16 %v85, %v83
    %v108 = vpack.c.b16 %v88, %v86
    %v109 = vpack.c.b16 %v89, %v87
    %v110 = vpack.c.b16 %v92, %v90
    %v111 = vpack.c.b16 %v93, %v91
    %v112 = vpack.c.b16 %v96, %v94
    %v113 = vpack.c.b16 %v97, %v95
    %130 = vmatpush.bf16.msra.mxu0 %v112
    %131 = vmatpush.bf16.msra.mxu0 %v110
    %132 = vmatpush.bf16.msra.mxu0 %v108
    %133 = vmatpush.bf16.msra.mxu0 %v106
    %134 = vmatpush.bf16.msra.mxu0 %v104
    %135 = vmatpush.bf16.msra.mxu0 %v102
    %136 = vmatpush.bf16.msra.mxu0 %v100
    %137 = vmatpush.bf16.msra.mxu0 %v98
    %138 = vmatmul.bf16.gmra.mxu0 %v27
    %v139 = vpop.f32.mrf.mxu0
    %v140 = vadd.f32 %v46, %v139
    %v141 = vpop.f32.mrf.mxu0
    %142 = vdwg.mxu0
    %143 = vmatpush.bf16.msra.mxu0 %v113
    %144 = vmatpush.bf16.msra.mxu0 %v111
    %145 = vmatpush.bf16.msra.mxu0 %v109
    %146 = vmatpush.bf16.msra.mxu0 %v107
    %147 = vmatpush.bf16.msra.mxu0 %v105
    %148 = vmatpush.bf16.msra.mxu0 %v103
    %149 = vmatpush.bf16.msra.mxu0 %v101
    %150 = vmatpush.bf16.msra.mxu0 %v99
    %151 = vmatmul.bf16.gmra.mxu0 %v27
    %v152 = vpop.f32.mrf.mxu0
    %v153 = vadd.f32 %v47, %v152
    %v154 = vpop.f32.mrf.mxu0
    %155 = vdwg.mxu0
    %v156 = vmul.f32 %v140, 0.2
    %v157 = vmul.f32 %v153, 0.2
    %v158 = vmax.f32 %v140, %v156
    %v159 = vmax.f32 %v153, %v157
    %v160 = vpack.c.bf16 %v158, %v158
    %v161 = vpack.c.bf16 %v159, %v159
    %v162 = vld [vmem:[%s3] sm:$0xff]
    %v163 = vld [vmem:[%s3 + $0x8] sm:$0xff]
    %v164 = vld [vmem:[%s3 + $0x10] sm:$0xff]
    %v165 = vld [vmem:[%s3 + $0x18] sm:$0xff]
    %v166 = vld [vmem:[%s3 + $0x20] sm:$0xff]
    %v167 = vld [vmem:[%s3 + $0x28] sm:$0xff]
    %v168 = vld [vmem:[%s3 + $0x30] sm:$0xff]
    %v169 = vld [vmem:[%s3 + $0x38] sm:$0xff]
    %v170 = vld [vmem:[%s3 + $0x40] sm:$0xff]
    %v171 = vld [vmem:[%s3 + $0x48] sm:$0xff]
    %v172 = vld [vmem:[%s3 + $0x50] sm:$0xff]
    %v173 = vld [vmem:[%s3 + $0x58] sm:$0xff]
    %v174 = vld [vmem:[%s3 + $0x60] sm:$0xff]
    %v175 = vld [vmem:[%s3 + $0x68] sm:$0xff]
    %v176 = vld [vmem:[%s3 + $0x70] sm:$0xff]
    %v177 = vld [vmem:[%s3 + $0x78] sm:$0xff]
    %v178 = vld [vmem:[%s3 + $0x80] sm:$0xff]
    %v179 = vld [vmem:[%s3 + $0x88] sm:$0xff]
    %v180 = vld [vmem:[%s3 + $0x90] sm:$0xff]
    %v181 = vld [vmem:[%s3 + $0x98] sm:$0xff]
    %v182 = vld [vmem:[%s3 + $0xa0] sm:$0xff]
    %v183 = vld [vmem:[%s3 + $0xa8] sm:$0xff]
    %v184 = vld [vmem:[%s3 + $0xb0] sm:$0xff]
    %v185 = vld [vmem:[%s3 + $0xb8] sm:$0xff]
    %v186 = vld [vmem:[%s3 + $0xc0] sm:$0xff]
    %v187 = vld [vmem:[%s3 + $0xc8] sm:$0xff]
    %v188 = vld [vmem:[%s3 + $0xd0] sm:$0xff]
    %v189 = vld [vmem:[%s3 + $0xd8] sm:$0xff]
    %v190 = vld [vmem:[%s3 + $0xe0] sm:$0xff]
    %v191 = vld [vmem:[%s3 + $0xe8] sm:$0xff]
    %v192 = vld [vmem:[%s3 + $0xf0] sm:$0xff]
    %v193 = vld [vmem:[%s3 + $0xf8] sm:$0xff]
    %v194 = vld [vmem:[%s3 + $0x100] sm:$0xff]
    %v195 = vld [vmem:[%s3 + $0x108] sm:$0xff]
    %v196 = vld [vmem:[%s3 + $0x110] sm:$0xff]
    %v197 = vld [vmem:[%s3 + $0x118] sm:$0xff]
    %v198 = vld [vmem:[%s3 + $0x120] sm:$0xff]
    %v199 = vld [vmem:[%s3 + $0x128] sm:$0xff]
    %v200 = vld [vmem:[%s3 + $0x130] sm:$0xff]
    %v201 = vld [vmem:[%s3 + $0x138] sm:$0xff]
    %v202 = vld [vmem:[%s3 + $0x140] sm:$0xff]
    %v203 = vld [vmem:[%s3 + $0x148] sm:$0xff]
    %v204 = vld [vmem:[%s3 + $0x150] sm:$0xff]
    %v205 = vld [vmem:[%s3 + $0x158] sm:$0xff]
    %v206 = vld [vmem:[%s3 + $0x160] sm:$0xff]
    %v207 = vld [vmem:[%s3 + $0x168] sm:$0xff]
    %v208 = vld [vmem:[%s3 + $0x170] sm:$0xff]
    %v209 = vld [vmem:[%s3 + $0x178] sm:$0xff]
    %v210 = vld [vmem:[%s3 + $0x180] sm:$0xff]
    %v211 = vld [vmem:[%s3 + $0x188] sm:$0xff]
    %v212 = vld [vmem:[%s3 + $0x190] sm:$0xff]
    %v213 = vld [vmem:[%s3 + $0x198] sm:$0xff]
    %v214 = vld [vmem:[%s3 + $0x1a0] sm:$0xff]
    %v215 = vld [vmem:[%s3 + $0x1a8] sm:$0xff]
    %v216 = vld [vmem:[%s3 + $0x1b0] sm:$0xff]
    %v217 = vld [vmem:[%s3 + $0x1b8] sm:$0xff]
    %v218 = vld [vmem:[%s3 + $0x1c0] sm:$0xff]
    %v219 = vld [vmem:[%s3 + $0x1c8] sm:$0xff]
    %v220 = vld [vmem:[%s3 + $0x1d0] sm:$0xff]
    %v221 = vld [vmem:[%s3 + $0x1d8] sm:$0xff]
    %v222 = vld [vmem:[%s3 + $0x1e0] sm:$0xff]
    %v223 = vld [vmem:[%s3 + $0x1e8] sm:$0xff]
    %v224 = vld [vmem:[%s3 + $0x1f0] sm:$0xff]
    %v225 = vld [vmem:[%s3 + $0x1f8] sm:$0xff]
    %v226 = vld [vmem:[%s4] sm:$0xf]
    %v228 = vperm.slane %v226, 0
    %v229 = vperm.slane %v226, 1
    %v230 = vperm.slane %v226, 2
    %v231 = vperm.slane %v226, 3
    %v300 = vunpack.c.l.b16 %v162
    %v301 = vunpack.c.h.b16 %v162
    %v302 = vunpack.c.l.b16 %v163
    %v303 = vunpack.c.h.b16 %v163
    %v304 = vunpack.c.l.b16 %v164
    %v305 = vunpack.c.h.b16 %v164
    %v306 = vunpack.c.l.b16 %v165
    %v307 = vunpack.c.h.b16 %v165
    %v308 = vunpack.c.l.b16 %v166
    %v309 = vunpack.c.h.b16 %v166
    %v310 = vunpack.c.l.b16 %v167
    %v311 = vunpack.c.h.b16 %v167
    %v312 = vunpack.c.l.b16 %v168
    %v313 = vunpack.c.h.b16 %v168
    %v314 = vunpack.c.l.b16 %v169
    %v315 = vunpack.c.h.b16 %v169
    %v316 = vunpack.c.l.b16 %v170
    %v317 = vunpack.c.h.b16 %v170
    %v318 = vunpack.c.l.b16 %v171
    %v319 = vunpack.c.h.b16 %v171
    %v320 = vunpack.c.l.b16 %v172
    %v321 = vunpack.c.h.b16 %v172
    %v322 = vunpack.c.l.b16 %v173
    %v323 = vunpack.c.h.b16 %v173
    %v324 = vunpack.c.l.b16 %v174
    %v325 = vunpack.c.h.b16 %v174
    %v326 = vunpack.c.l.b16 %v175
    %v327 = vunpack.c.h.b16 %v175
    %v328 = vunpack.c.l.b16 %v176
    %v329 = vunpack.c.h.b16 %v176
    %v330 = vunpack.c.l.b16 %v177
    %v331 = vunpack.c.h.b16 %v177
    %v332 = vunpack.c.l.b16 %v178
    %v333 = vunpack.c.h.b16 %v178
    %v334 = vunpack.c.l.b16 %v179
    %v335 = vunpack.c.h.b16 %v179
    %v336 = vunpack.c.l.b16 %v180
    %v337 = vunpack.c.h.b16 %v180
    %v338 = vunpack.c.l.b16 %v181
    %v339 = vunpack.c.h.b16 %v181
    %v340 = vunpack.c.l.b16 %v182
    %v341 = vunpack.c.h.b16 %v182
    %v342 = vunpack.c.l.b16 %v183
    %v343 = vunpack.c.h.b16 %v183
    %v344 = vunpack.c.l.b16 %v184
    %v345 = vunpack.c.h.b16 %v184
    %v346 = vunpack.c.l.b16 %v185
    %v347 = vunpack.c.h.b16 %v185
    %v348 = vunpack.c.l.b16 %v186
    %v349 = vunpack.c.h.b16 %v186
    %v350 = vunpack.c.l.b16 %v187
    %v351 = vunpack.c.h.b16 %v187
    %v352 = vunpack.c.l.b16 %v188
    %v353 = vunpack.c.h.b16 %v188
    %v354 = vunpack.c.l.b16 %v189
    %v355 = vunpack.c.h.b16 %v189
    %v356 = vunpack.c.l.b16 %v190
    %v357 = vunpack.c.h.b16 %v190
    %v358 = vunpack.c.l.b16 %v191
    %v359 = vunpack.c.h.b16 %v191
    %v360 = vunpack.c.l.b16 %v192
    %v361 = vunpack.c.h.b16 %v192
    %v362 = vunpack.c.l.b16 %v193
    %v363 = vunpack.c.h.b16 %v193
    %v364 = vunpack.c.l.b16 %v194
    %v365 = vunpack.c.h.b16 %v194
    %v366 = vunpack.c.l.b16 %v195
    %v367 = vunpack.c.h.b16 %v195
    %v368 = vunpack.c.l.b16 %v196
    %v369 = vunpack.c.h.b16 %v196
    %v370 = vunpack.c.l.b16 %v197
    %v371 = vunpack.c.h.b16 %v197
    %v372 = vunpack.c.l.b16 %v198
    %v373 = vunpack.c.h.b16 %v198
    %v374 = vunpack.c.l.b16 %v199
    %v375 = vunpack.c.h.b16 %v199
    %v376 = vunpack.c.l.b16 %v200
    %v377 = vunpack.c.h.b16 %v200
    %v378 = vunpack.c.l.b16 %v201
    %v379 = vunpack.c.h.b16 %v201
    %v380 = vunpack.c.l.b16 %v202
    %v381 = vunpack.c.h.b16 %v202
    %v382 = vunpack.c.l.b16 %v203
    %v383 = vunpack.c.h.b16 %v203
    %v384 = vunpack.c.l.b16 %v204
    %v385 = vunpack.c.h.b16 %v204
    %v386 = vunpack.c.l.b16 %v205
    %v387 = vunpack.c.h.b16 %v205
    %v388 = vunpack.c.l.b16 %v206
    %v389 = vunpack.c.h.b16 %v206
    %v390 = vunpack.c.l.b16 %v207
    %v391 = vunpack.c.h.b16 %v207
    %v392 = vunpack.c.l.b16 %v208
    %v393 = vunpack.c.h.b16 %v208
    %v394 = vunpack.c.l.b16 %v209
    %v395 = vunpack.c.h.b16 %v209
    %v396 = vunpack.c.l.b16 %v210
    %v397 = vunpack.c.h.b16 %v210
    %v398 = vunpack.c.l.b16 %v211
    %v399 = vunpack.c.h.b16 %v211
    %v400 = vunpack.c.l.b16 %v212
    %v401 = vunpack.c.h.b16 %v212
    %v402 = vunpack.c.l.b16 %v213
    %v403 = vunpack.c.h.b16 %v213
    %v404 = vunpack.c.l.b16 %v214
    %v405 = vunpack.c.h.b16 %v214
    %v406 = vunpack.c.l.b16 %v215
    %v407 = vunpack.c.h.b16 %v215
    %v408 = vunpack.c.l.b16 %v216
    %v409 = vunpack.c.h.b16 %v216
    %v410 = vunpack.c.l.b16 %v217
    %v411 = vunpack.c.h.b16 %v217
    %v412 = vunpack.c.l.b16 %v218
    %v413 = vunpack.c.h.b16 %v218
    %v414 = vunpack.c.l.b16 %v219
    %v415 = vunpack.c.h.b16 %v219
    %v416 = vunpack.c.l.b16 %v220
    %v417 = vunpack.c.h.b16 %v220
    %v418 = vunpack.c.l.b16 %v221
    %v419 = vunpack.c.h.b16 %v221
    %v420 = vunpack.c.l.b16 %v222
    %v421 = vunpack.c.h.b16 %v222
    %v422 = vunpack.c.l.b16 %v223
    %v423 = vunpack.c.h.b16 %v223
    %v424 = vunpack.c.l.b16 %v224
    %v425 = vunpack.c.h.b16 %v224
    %v426 = vunpack.c.l.b16 %v225
    %v427 = vunpack.c.h.b16 %v225
    %v428 = vpack.c.b16 %v304, %v300
    %v429 = vpack.c.b16 %v305, %v301
    %v430 = vpack.c.b16 %v306, %v302
    %v431 = vpack.c.b16 %v307, %v303
    %v432 = vpack.c.b16 %v312, %v308
    %v433 = vpack.c.b16 %v313, %v309
    %v434 = vpack.c.b16 %v314, %v310
    %v435 = vpack.c.b16 %v315, %v311
    %v436 = vpack.c.b16 %v320, %v316
    %v437 = vpack.c.b16 %v321, %v317
    %v438 = vpack.c.b16 %v322, %v318
    %v439 = vpack.c.b16 %v323, %v319
    %v440 = vpack.c.b16 %v328, %v324
    %v441 = vpack.c.b16 %v329, %v325
    %v442 = vpack.c.b16 %v330, %v326
    %v443 = vpack.c.b16 %v331, %v327
    %v444 = vpack.c.b16 %v336, %v332
    %v445 = vpack.c.b16 %v337, %v333
    %v446 = vpack.c.b16 %v338, %v334
    %v447 = vpack.c.b16 %v339, %v335
    %v448 = vpack.c.b16 %v344, %v340
    %v449 = vpack.c.b16 %v345, %v341
    %v450 = vpack.c.b16 %v346, %v342
    %v451 = vpack.c.b16 %v347, %v343
    %v452 = vpack.c.b16 %v352, %v348
    %v453 = vpack.c.b16 %v353, %v349
    %v454 = vpack.c.b16 %v354, %v350
    %v455 = vpack.c.b16 %v355, %v351
    %v456 = vpack.c.b16 %v360, %v356
    %v457 = vpack.c.b16 %v361, %v357
    %v458 = vpack.c.b16 %v362, %v358
    %v459 = vpack.c.b16 %v363, %v359
    %v460 = vpack.c.b16 %v368, %v364
    %v461 = vpack.c.b16 %v369, %v365
    %v462 = vpack.c.b16 %v370, %v366
    %v463 = vpack.c.b16 %v371, %v367
    %v464 = vpack.c.b16 %v376, %v372
    %v465 = vpack.c.b16 %v377, %v373
    %v466 = vpack.c.b16 %v378, %v374
    %v467 = vpack.c.b16 %v379, %v375
    %v468 = vpack.c.b16 %v384, %v380
    %v469 = vpack.c.b16 %v385, %v381
    %v470 = vpack.c.b16 %v386, %v382
    %v471 = vpack.c.b16 %v387, %v383
    %v472 = vpack.c.b16 %v392, %v388
    %v473 = vpack.c.b16 %v393, %v389
    %v474 = vpack.c.b16 %v394, %v390
    %v475 = vpack.c.b16 %v395, %v391
    %v476 = vpack.c.b16 %v400, %v396
    %v477 = vpack.c.b16 %v401, %v397
    %v478 = vpack.c.b16 %v402, %v398
    %v479 = vpack.c.b16 %v403, %v399
    %v480 = vpack.c.b16 %v408, %v404
    %v481 = vpack.c.b16 %v409, %v405
    %v482 = vpack.c.b16 %v410, %v406
    %v483 = vpack.c.b16 %v411, %v407
    %v484 = vpack.c.b16 %v416, %v412
    %v485 = vpack.c.b16 %v417, %v413
    %v486 = vpack.c.b16 %v418, %v414
    %v487 = vpack.c.b16 %v419, %v415
    %v488 = vpack.c.b16 %v424, %v420
    %v489 = vpack.c.b16 %v425, %v421
    %v490 = vpack.c.b16 %v426, %v422
    %v491 = vpack.c.b16 %v427, %v423
    %556 = vmatpush.bf16.msra.mxu0 %v456
    %557 = vmatpush.bf16.msra.mxu0 %v452
    %558 = vmatpush.bf16.msra.mxu0 %v448
    %559 = vmatpush.bf16.msra.mxu0 %v444
    %560 = vmatpush.bf16.msra.mxu0 %v440
    %561 = vmatpush.bf16.msra.mxu0 %v436
    %562 = vmatpush.bf16.msra.mxu0 %v432
    %563 = vmatpush.bf16.msra.mxu0 %v428
    %564 = vmatmul.bf16.gmra.mxu0 %v160
    %v565 = vpop.f32.mrf.mxu0
    %v566 = vadd.f32 %v228, %v565
    %v567 = vpop.f32.mrf.mxu0
    %568 = vdwg.mxu0
    %569 = vmatpush.bf16.msra.mxu0 %v488
    %570 = vmatpush.bf16.msra.mxu0 %v484
    %571 = vmatpush.bf16.msra.mxu0 %v480
    %572 = vmatpush.bf16.msra.mxu0 %v476
    %573 = vmatpush.bf16.msra.mxu0 %v472
    %574 = vmatpush.bf16.msra.mxu0 %v468
    %575 = vmatpush.bf16.msra.mxu0 %v464
    %576 = vmatpush.bf16.msra.mxu0 %v460
    %577 = vmatmul.bf16.gmra.mxu0 %v161
    %v578 = vpop.f32.mrf.mxu0
    %v579 = vadd.f32 %v566, %v578
    %v580 = vpop.f32.mrf.mxu0
    %581 = vdwg.mxu0
    %582 = vmatpush.bf16.msra.mxu0 %v457
    %583 = vmatpush.bf16.msra.mxu0 %v453
    %584 = vmatpush.bf16.msra.mxu0 %v449
    %585 = vmatpush.bf16.msra.mxu0 %v445
    %586 = vmatpush.bf16.msra.mxu0 %v441
    %587 = vmatpush.bf16.msra.mxu0 %v437
    %588 = vmatpush.bf16.msra.mxu0 %v433
    %589 = vmatpush.bf16.msra.mxu0 %v429
    %590 = vmatmul.bf16.gmra.mxu0 %v160
    %v591 = vpop.f32.mrf.mxu0
    %v592 = vadd.f32 %v229, %v591
    %v593 = vpop.f32.mrf.mxu0
    %594 = vdwg.mxu0
    %595 = vmatpush.bf16.msra.mxu0 %v489
    %596 = vmatpush.bf16.msra.mxu0 %v485
    %597 = vmatpush.bf16.msra.mxu0 %v481
    %598 = vmatpush.bf16.msra.mxu0 %v477
    %599 = vmatpush.bf16.msra.mxu0 %v473
    %600 = vmatpush.bf16.msra.mxu0 %v469
    %601 = vmatpush.bf16.msra.mxu0 %v465
    %602 = vmatpush.bf16.msra.mxu0 %v461
    %603 = vmatmul.bf16.gmra.mxu0 %v161
    %v604 = vpop.f32.mrf.mxu0
    %v605 = vadd.f32 %v592, %v604
    %v606 = vpop.f32.mrf.mxu0
    %607 = vdwg.mxu0
    %608 = vmatpush.bf16.msra.mxu0 %v458
    %609 = vmatpush.bf16.msra.mxu0 %v454
    %610 = vmatpush.bf16.msra.mxu0 %v450
    %611 = vmatpush.bf16.msra.mxu0 %v446
    %612 = vmatpush.bf16.msra.mxu0 %v442
    %613 = vmatpush.bf16.msra.mxu0 %v438
    %614 = vmatpush.bf16.msra.mxu0 %v434
    %615 = vmatpush.bf16.msra.mxu0 %v430
    %616 = vmatmul.bf16.gmra.mxu0 %v160
    %v617 = vpop.f32.mrf.mxu0
    %v618 = vadd.f32 %v230, %v617
    %v619 = vpop.f32.mrf.mxu0
    %620 = vdwg.mxu0
    %621 = vmatpush.bf16.msra.mxu0 %v490
    %622 = vmatpush.bf16.msra.mxu0 %v486
    %623 = vmatpush.bf16.msra.mxu0 %v482
    %624 = vmatpush.bf16.msra.mxu0 %v478
    %625 = vmatpush.bf16.msra.mxu0 %v474
    %626 = vmatpush.bf16.msra.mxu0 %v470
    %627 = vmatpush.bf16.msra.mxu0 %v466
    %628 = vmatpush.bf16.msra.mxu0 %v462
    %629 = vmatmul.bf16.gmra.mxu0 %v161
    %v630 = vpop.f32.mrf.mxu0
    %v631 = vadd.f32 %v618, %v630
    %v632 = vpop.f32.mrf.mxu0
    %633 = vdwg.mxu0
    %634 = vmatpush.bf16.msra.mxu0 %v459
    %635 = vmatpush.bf16.msra.mxu0 %v455
    %636 = vmatpush.bf16.msra.mxu0 %v451
    %637 = vmatpush.bf16.msra.mxu0 %v447
    %638 = vmatpush.bf16.msra.mxu0 %v443
    %639 = vmatpush.bf16.msra.mxu0 %v439
    %640 = vmatpush.bf16.msra.mxu0 %v435
    %641 = vmatpush.bf16.msra.mxu0 %v431
    %642 = vmatmul.bf16.gmra.mxu0 %v160
    %v643 = vpop.f32.mrf.mxu0
    %v644 = vadd.f32 %v231, %v643
    %v645 = vpop.f32.mrf.mxu0
    %646 = vdwg.mxu0
    %647 = vmatpush.bf16.msra.mxu0 %v491
    %648 = vmatpush.bf16.msra.mxu0 %v487
    %649 = vmatpush.bf16.msra.mxu0 %v483
    %650 = vmatpush.bf16.msra.mxu0 %v479
    %651 = vmatpush.bf16.msra.mxu0 %v475
    %652 = vmatpush.bf16.msra.mxu0 %v471
    %653 = vmatpush.bf16.msra.mxu0 %v467
    %654 = vmatpush.bf16.msra.mxu0 %v463
    %655 = vmatmul.bf16.gmra.mxu0 %v161
    %v656 = vpop.f32.mrf.mxu0
    %v657 = vadd.f32 %v644, %v656
    %v658 = vpop.f32.mrf.mxu0
    %659 = vdwg.mxu0
    %v660 = vmul.f32 %v579, 0.2
    %v661 = vmul.f32 %v605, 0.2
    %v662 = vmul.f32 %v631, 0.2
    %v663 = vmul.f32 %v657, 0.2
    %v664 = vmax.f32 %v579, %v660
    %v665 = vmax.f32 %v605, %v661
    %v666 = vmax.f32 %v631, %v662
    %v667 = vmax.f32 %v657, %v663
    %v668 = vpack.c.bf16 %v664, %v664
    %v669 = vpack.c.bf16 %v665, %v665
    %v670 = vpack.c.bf16 %v666, %v666
    %v671 = vpack.c.bf16 %v667, %v667
    %v672 = vld [vmem:[%s5] sm:$0xff]
    %v673 = vld [vmem:[%s5 + $0x8] sm:$0xff]
    %v674 = vld [vmem:[%s5 + $0x10] sm:$0xff]
    %v675 = vld [vmem:[%s5 + $0x18] sm:$0xf]
    %v676 = vld [vmem:[%s5 + $0x1c] sm:$0xff]
    %v677 = vld [vmem:[%s5 + $0x24] sm:$0xff]
    %v678 = vld [vmem:[%s5 + $0x2c] sm:$0xff]
    %v679 = vld [vmem:[%s5 + $0x34] sm:$0xf]
    %v680 = vld [vmem:[%s5 + $0x38] sm:$0xff]
    %v681 = vld [vmem:[%s5 + $0x40] sm:$0xff]
    %v682 = vld [vmem:[%s5 + $0x48] sm:$0xff]
    %v683 = vld [vmem:[%s5 + $0x50] sm:$0xf]
    %v684 = vld [vmem:[%s5 + $0x54] sm:$0xff]
    %v685 = vld [vmem:[%s5 + $0x5c] sm:$0xff]
    %v686 = vld [vmem:[%s5 + $0x64] sm:$0xff]
    %v687 = vld [vmem:[%s5 + $0x6c] sm:$0xf]
    %v688 = vld [vmem:[%s5 + $0x70] sm:$0xff]
    %v689 = vld [vmem:[%s5 + $0x78] sm:$0xff]
    %v690 = vld [vmem:[%s5 + $0x80] sm:$0xff]
    %v691 = vld [vmem:[%s5 + $0x88] sm:$0xf]
    %v692 = vld [vmem:[%s5 + $0x8c] sm:$0xff]
    %v693 = vld [vmem:[%s5 + $0x94] sm:$0xff]
    %v694 = vld [vmem:[%s5 + $0x9c] sm:$0xff]
    %v695 = vld [vmem:[%s5 + $0xa4] sm:$0xf]
    %v696 = vld [vmem:[%s5 + $0xa8] sm:$0xff]
    %v697 = vld [vmem:[%s5 + $0xb0] sm:$0xff]
    %v698 = vld [vmem:[%s5 + $0xb8] sm:$0xff]
    %v699 = vld [vmem:[%s5 + $0xc0] sm:$0xf]
    %v700 = vld [vmem:[%s5 + $0xc4] sm:$0xff]
    %v701 = vld [vmem:[%s5 + $0xcc] sm:$0xff]
    %v702 = vld [vmem:[%s5 + $0xd4] sm:$0xff]
    %v703 = vld [vmem:[%s5 + $0xdc] sm:$0xf]
    %v704 = vld [vmem:[%s5 + $0xe0] sm:$0xff]
    %v705 = vld [vmem:[%s5 + $0xe8] sm:$0xff]
    %v706 = vld [vmem:[%s5 + $0xf0] sm:$0xff]
    %v707 = vld [vmem:[%s5 + $0xf8] sm:$0xf]
    %v708 = vld [vmem:[%s5 + $0xfc] sm:$0xff]
    %v709 = vld [vmem:[%s5 + $0x104] sm:$0xff]
    %v710 = vld [vmem:[%s5 + $0x10c] sm:$0xff]
    %v711 = vld [vmem:[%s5 + $0x114] sm:$0xf]
    %v712 = vld [vmem:[%s5 + $0x118] sm:$0xff]
    %v713 = vld [vmem:[%s5 + $0x120] sm:$0xff]
    %v714 = vld [vmem:[%s5 + $0x128] sm:$0xff]
    %v715 = vld [vmem:[%s5 + $0x130] sm:$0xf]
    %v716 = vld [vmem:[%s5 + $0x134] sm:$0xff]
    %v717 = vld [vmem:[%s5 + $0x13c] sm:$0xff]
    %v718 = vld [vmem:[%s5 + $0x144] sm:$0xff]
    %v719 = vld [vmem:[%s5 + $0x14c] sm:$0xf]
    %v720 = vld [vmem:[%s5 + $0x150] sm:$0xff]
    %v721 = vld [vmem:[%s5 + $0x158] sm:$0xff]
    %v722 = vld [vmem:[%s5 + $0x160] sm:$0xff]
    %v723 = vld [vmem:[%s5 + $0x168] sm:$0xf]
    %v724 = vld [vmem:[%s5 + $0x16c] sm:$0xff]
    %v725 = vld [vmem:[%s5 + $0x174] sm:$0xff]
    %v726 = vld [vmem:[%s5 + $0x17c] sm:$0xff]
    %v727 = vld [vmem:[%s5 + $0x184] sm:$0xf]
    %v728 = vld [vmem:[%s5 + $0x188] sm:$0xff]
    %v729 = vld [vmem:[%s5 + $0x190] sm:$0xff]
    %v730 = vld [vmem:[%s5 + $0x198] sm:$0xff]
    %v731 = vld [vmem:[%s5 + $0x1a0] sm:$0xf]
    %v732 = vld [vmem:[%s5 + $0x1a4] sm:$0xff]
    %v733 = vld [vmem:[%s5 + $0x1ac] sm:$0xff]
    %v734 = vld [vmem:[%s5 + $0x1b4] sm:$0xff]
    %v735 = vld [vmem:[%s5 + $0x1bc] sm:$0xf]
    %v736 = vld [vmem:[%s5 + $0x1c0] sm:$0xff]
    %v737 = vld [vmem:[%s5 + $0x1c8] sm:$0xff]
    %v738 = vld [vmem:[%s5 + $0x1d0] sm:$0xff]
    %v739 = vld [vmem:[%s5 + $0x1d8] sm:$0xf]
    %v740 = vld [vmem:[%s5 + $0x1dc] sm:$0xff]
    %v741 = vld [vmem:[%s5 + $0x1e4] sm:$0xff]
    %v742 = vld [vmem:[%s5 + $0x1ec] sm:$0xff]
    %v743 = vld [vmem:[%s5 + $0x1f4] sm:$0xf]
    %v744 = vld [vmem:[%s5 + $0x1f8] sm:$0xff]
    %v745 = vld [vmem:[%s5 + $0x200] sm:$0xff]
    %v746 = vld [vmem:[%s5 + $0x208] sm:$0xff]
    %v747 = vld [vmem:[%s5 + $0x210] sm:$0xf]
    %v748 = vld [vmem:[%s5 + $0x214] sm:$0xff]
    %v749 = vld [vmem:[%s5 + $0x21c] sm:$0xff]
    %v750 = vld [vmem:[%s5 + $0x224] sm:$0xff]
    %v751 = vld [vmem:[%s5 + $0x22c] sm:$0xf]
    %v752 = vld [vmem:[%s5 + $0x230] sm:$0xff]
    %v753 = vld [vmem:[%s5 + $0x238] sm:$0xff]
    %v754 = vld [vmem:[%s5 + $0x240] sm:$0xff]
    %v755 = vld [vmem:[%s5 + $0x248] sm:$0xf]
    %v756 = vld [vmem:[%s5 + $0x24c] sm:$0xff]
    %v757 = vld [vmem:[%s5 + $0x254] sm:$0xff]
    %v758 = vld [vmem:[%s5 + $0x25c] sm:$0xff]
    %v759 = vld [vmem:[%s5 + $0x264] sm:$0xf]
    %v760 = vld [vmem:[%s5 + $0x268] sm:$0xff]
    %v761 = vld [vmem:[%s5 + $0x270] sm:$0xff]
    %v762 = vld [vmem:[%s5 + $0x278] sm:$0xff]
    %v763 = vld [vmem:[%s5 + $0x280] sm:$0xf]
    %v764 = vld [vmem:[%s5 + $0x284] sm:$0xff]
    %v765 = vld [vmem:[%s5 + $0x28c] sm:$0xff]
    %v766 = vld [vmem:[%s5 + $0x294] sm:$0xff]
    %v767 = vld [vmem:[%s5 + $0x29c] sm:$0xf]
    %v768 = vld [vmem:[%s5 + $0x2a0] sm:$0xff]
    %v769 = vld [vmem:[%s5 + $0x2a8] sm:$0xff]
    %v770 = vld [vmem:[%s5 + $0x2b0] sm:$0xff]
    %v771 = vld [vmem:[%s5 + $0x2b8] sm:$0xf]
    %v772 = vld [vmem:[%s5 + $0x2bc] sm:$0xff]
    %v773 = vld [vmem:[%s5 + $0x2c4] sm:$0xff]
    %v774 = vld [vmem:[%s5 + $0x2cc] sm:$0xff]
    %v775 = vld [vmem:[%s5 + $0x2d4] sm:$0xf]
    %v776 = vld [vmem:[%s5 + $0x2d8] sm:$0xff]
    %v777 = vld [vmem:[%s5 + $0x2e0] sm:$0xff]
    %v778 = vld [vmem:[%s5 + $0x2e8] sm:$0xff]
    %v779 = vld [vmem:[%s5 + $0x2f0] sm:$0xf]
    %v780 = vld [vmem:[%s5 + $0x2f4] sm:$0xff]
    %v781 = vld [vmem:[%s5 + $0x2fc] sm:$0xff]
    %v782 = vld [vmem:[%s5 + $0x304] sm:$0xff]
    %v783 = vld [vmem:[%s5 + $0x30c] sm:$0xf]
    %v784 = vld [vmem:[%s5 + $0x310] sm:$0xff]
    %v785 = vld [vmem:[%s5 + $0x318] sm:$0xff]
    %v786 = vld [vmem:[%s5 + $0x320] sm:$0xff]
    %v787 = vld [vmem:[%s5 + $0x328] sm:$0xf]
    %v788 = vld [vmem:[%s5 + $0x32c] sm:$0xff]
    %v789 = vld [vmem:[%s5 + $0x334] sm:$0xff]
    %v790 = vld [vmem:[%s5 + $0x33c] sm:$0xff]
    %v791 = vld [vmem:[%s5 + $0x344] sm:$0xf]
    %v792 = vld [vmem:[%s5 + $0x348] sm:$0xff]
    %v793 = vld [vmem:[%s5 + $0x350] sm:$0xff]
    %v794 = vld [vmem:[%s5 + $0x358] sm:$0xff]
    %v795 = vld [vmem:[%s5 + $0x360] sm:$0xf]
    %v796 = vld [vmem:[%s5 + $0x364] sm:$0xff]
    %v797 = vld [vmem:[%s5 + $0x36c] sm:$0xff]
    %v798 = vld [vmem:[%s5 + $0x374] sm:$0xff]
    %v799 = vld [vmem:[%s5 + $0x37c] sm:$0xf]
    %v800 = vld [vmem:[%s5 + $0x380] sm:$0xff]
    %v801 = vld [vmem:[%s5 + $0x388] sm:$0xff]
    %v802 = vld [vmem:[%s5 + $0x390] sm:$0xff]
    %v803 = vld [vmem:[%s5 + $0x398] sm:$0xf]
    %v804 = vld [vmem:[%s5 + $0x39c] sm:$0xff]
    %v805 = vld [vmem:[%s5 + $0x3a4] sm:$0xff]
    %v806 = vld [vmem:[%s5 + $0x3ac] sm:$0xff]
    %v807 = vld [vmem:[%s5 + $0x3b4] sm:$0xf]
    %v808 = vld [vmem:[%s5 + $0x3b8] sm:$0xff]
    %v809 = vld [vmem:[%s5 + $0x3c0] sm:$0xff]
    %v810 = vld [vmem:[%s5 + $0x3c8] sm:$0xff]
    %v811 = vld [vmem:[%s5 + $0x3d0] sm:$0xf]
    %v812 = vld [vmem:[%s5 + $0x3d4] sm:$0xff]
    %v813 = vld [vmem:[%s5 + $0x3dc] sm:$0xff]
    %v814 = vld [vmem:[%s5 + $0x3e4] sm:$0xff]
    %v815 = vld [vmem:[%s5 + $0x3ec] sm:$0xf]
    %v816 = vld [vmem:[%s5 + $0x3f0] sm:$0xff]
    %v817 = vld [vmem:[%s5 + $0x3f8] sm:$0xff]
    %v818 = vld [vmem:[%s5 + $0x400] sm:$0xff]
    %v819 = vld [vmem:[%s5 + $0x408] sm:$0xf]
    %v820 = vld [vmem:[%s5 + $0x40c] sm:$0xff]
    %v821 = vld [vmem:[%s5 + $0x414] sm:$0xff]
    %v822 = vld [vmem:[%s5 + $0x41c] sm:$0xff]
    %v823 = vld [vmem:[%s5 + $0x424] sm:$0xf]
    %v824 = vld [vmem:[%s5 + $0x428] sm:$0xff]
    %v825 = vld [vmem:[%s5 + $0x430] sm:$0xff]
    %v826 = vld [vmem:[%s5 + $0x438] sm:$0xff]
    %v827 = vld [vmem:[%s5 + $0x440] sm:$0xf]
    %v828 = vld [vmem:[%s5 + $0x444] sm:$0xff]
    %v829 = vld [vmem:[%s5 + $0x44c] sm:$0xff]
    %v830 = vld [vmem:[%s5 + $0x454] sm:$0xff]
    %v831 = vld [vmem:[%s5 + $0x45c] sm:$0xf]
    %v832 = vld [vmem:[%s5 + $0x460] sm:$0xff]
    %v833 = vld [vmem:[%s5 + $0x468] sm:$0xff]
    %v834 = vld [vmem:[%s5 + $0x470] sm:$0xff]
    %v835 = vld [vmem:[%s5 + $0x478] sm:$0xf]
    %v836 = vld [vmem:[%s5 + $0x47c] sm:$0xff]
    %v837 = vld [vmem:[%s5 + $0x484] sm:$0xff]
    %v838 = vld [vmem:[%s5 + $0x48c] sm:$0xff]
    %v839 = vld [vmem:[%s5 + $0x494] sm:$0xf]
    %v840 = vld [vmem:[%s5 + $0x498] sm:$0xff]
    %v841 = vld [vmem:[%s5 + $0x4a0] sm:$0xff]
    %v842 = vld [vmem:[%s5 + $0x4a8] sm:$0xff]
    %v843 = vld [vmem:[%s5 + $0x4b0] sm:$0xf]
    %v844 = vld [vmem:[%s5 + $0x4b4] sm:$0xff]
    %v845 = vld [vmem:[%s5 + $0x4bc] sm:$0xff]
    %v846 = vld [vmem:[%s5 + $0x4c4] sm:$0xff]
    %v847 = vld [vmem:[%s5 + $0x4cc] sm:$0xf]
    %v848 = vld [vmem:[%s5 + $0x4d0] sm:$0xff]
    %v849 = vld [vmem:[%s5 + $0x4d8] sm:$0xff]
    %v850 = vld [vmem:[%s5 + $0x4e0] sm:$0xff]
    %v851 = vld [vmem:[%s5 + $0x4e8] sm:$0xf]
    %v852 = vld [vmem:[%s5 + $0x4ec] sm:$0xff]
    %v853 = vld [vmem:[%s5 + $0x4f4] sm:$0xff]
    %v854 = vld [vmem:[%s5 + $0x4fc] sm:$0xff]
    %v855 = vld [vmem:[%s5 + $0x504] sm:$0xf]
    %v856 = vld [vmem:[%s5 + $0x508] sm:$0xff]
    %v857 = vld [vmem:[%s5 + $0x510] sm:$0xff]
    %v858 = vld [vmem:[%s5 + $0x518] sm:$0xff]
    %v859 = vld [vmem:[%s5 + $0x520] sm:$0xf]
    %v860 = vld [vmem:[%s5 + $0x524] sm:$0xff]
    %v861 = vld [vmem:[%s5 + $0x52c] sm:$0xff]
    %v862 = vld [vmem:[%s5 + $0x534] sm:$0xff]
    %v863 = vld [vmem:[%s5 + $0x53c] sm:$0xf]
    %v864 = vld [vmem:[%s5 + $0x540] sm:$0xff]
    %v865 = vld [vmem:[%s5 + $0x548] sm:$0xff]
    %v866 = vld [vmem:[%s5 + $0x550] sm:$0xff]
    %v867 = vld [vmem:[%s5 + $0x558] sm:$0xf]
    %v868 = vld [vmem:[%s5 + $0x55c] sm:$0xff]
    %v869 = vld [vmem:[%s5 + $0x564] sm:$0xff]
    %v870 = vld [vmem:[%s5 + $0x56c] sm:$0xff]
    %v871 = vld [vmem:[%s5 + $0x574] sm:$0xf]
    %v872 = vld [vmem:[%s5 + $0x578] sm:$0xff]
    %v873 = vld [vmem:[%s5 + $0x580] sm:$0xff]
    %v874 = vld [vmem:[%s5 + $0x588] sm:$0xff]
    %v875 = vld [vmem:[%s5 + $0x590] sm:$0xf]
    %v876 = vld [vmem:[%s5 + $0x594] sm:$0xff]
    %v877 = vld [vmem:[%s5 + $0x59c] sm:$0xff]
    %v878 = vld [vmem:[%s5 + $0x5a4] sm:$0xff]
    %v879 = vld [vmem:[%s5 + $0x5ac] sm:$0xf]
    %v880 = vld [vmem:[%s5 + $0x5b0] sm:$0xff]
    %v881 = vld [vmem:[%s5 + $0x5b8] sm:$0xff]
    %v882 = vld [vmem:[%s5 + $0x5c0] sm:$0xff]
    %v883 = vld [vmem:[%s5 + $0x5c8] sm:$0xf]
    %v884 = vld [vmem:[%s5 + $0x5cc] sm:$0xff]
    %v885 = vld [vmem:[%s5 + $0x5d4] sm:$0xff]
    %v886 = vld [vmem:[%s5 + $0x5dc] sm:$0xff]
    %v887 = vld [vmem:[%s5 + $0x5e4] sm:$0xf]
    %v888 = vld [vmem:[%s5 + $0x5e8] sm:$0xff]
    %v889 = vld [vmem:[%s5 + $0x5f0] sm:$0xff]
    %v890 = vld [vmem:[%s5 + $0x5f8] sm:$0xff]
    %v891 = vld [vmem:[%s5 + $0x600] sm:$0xf]
    %v892 = vld [vmem:[%s5 + $0x604] sm:$0xff]
    %v893 = vld [vmem:[%s5 + $0x60c] sm:$0xff]
    %v894 = vld [vmem:[%s5 + $0x614] sm:$0xff]
    %v895 = vld [vmem:[%s5 + $0x61c] sm:$0xf]
    %v896 = vld [vmem:[%s5 + $0x620] sm:$0xff]
    %v897 = vld [vmem:[%s5 + $0x628] sm:$0xff]
    %v898 = vld [vmem:[%s5 + $0x630] sm:$0xff]
    %v899 = vld [vmem:[%s5 + $0x638] sm:$0xf]
    %v900 = vld [vmem:[%s5 + $0x63c] sm:$0xff]
    %v901 = vld [vmem:[%s5 + $0x644] sm:$0xff]
    %v902 = vld [vmem:[%s5 + $0x64c] sm:$0xff]
    %v903 = vld [vmem:[%s5 + $0x654] sm:$0xf]
    %v904 = vld [vmem:[%s5 + $0x658] sm:$0xff]
    %v905 = vld [vmem:[%s5 + $0x660] sm:$0xff]
    %v906 = vld [vmem:[%s5 + $0x668] sm:$0xff]
    %v907 = vld [vmem:[%s5 + $0x670] sm:$0xf]
    %v908 = vld [vmem:[%s5 + $0x674] sm:$0xff]
    %v909 = vld [vmem:[%s5 + $0x67c] sm:$0xff]
    %v910 = vld [vmem:[%s5 + $0x684] sm:$0xff]
    %v911 = vld [vmem:[%s5 + $0x68c] sm:$0xf]
    %v912 = vld [vmem:[%s5 + $0x690] sm:$0xff]
    %v913 = vld [vmem:[%s5 + $0x698] sm:$0xff]
    %v914 = vld [vmem:[%s5 + $0x6a0] sm:$0xff]
    %v915 = vld [vmem:[%s5 + $0x6a8] sm:$0xf]
    %v916 = vld [vmem:[%s5 + $0x6ac] sm:$0xff]
    %v917 = vld [vmem:[%s5 + $0x6b4] sm:$0xff]
    %v918 = vld [vmem:[%s5 + $0x6bc] sm:$0xff]
    %v919 = vld [vmem:[%s5 + $0x6c4] sm:$0xf]
    %v920 = vld [vmem:[%s5 + $0x6c8] sm:$0xff]
    %v921 = vld [vmem:[%s5 + $0x6d0] sm:$0xff]
    %v922 = vld [vmem:[%s5 + $0x6d8] sm:$0xff]
    %v923 = vld [vmem:[%s5 + $0x6e0] sm:$0xf]
    %v924 = vld [vmem:[%s5 + $0x6e4] sm:$0xff]
    %v925 = vld [vmem:[%s5 + $0x6ec] sm:$0xff]
    %v926 = vld [vmem:[%s5 + $0x6f4] sm:$0xff]
    %v927 = vld [vmem:[%s5 + $0x6fc] sm:$0xf]
    %v928 = vld [vmem:[%s6] sm:$0x7f]
    %v930 = vperm.slane %v928, 0
    %v931 = vperm.slane %v928, 1
    %v932 = vperm.slane %v928, 2
    %v933 = vperm.slane %v928, 3
    %v934 = vperm.slane %v928, 4
    %v935 = vperm.slane %v928, 5
    %v936 = vperm.slane %v928, 6
    %v1200 = vunpack.c.l.b16 %v672
    %v1201 = vunpack.c.h.b16 %v672
    %v1202 = vunpack.c.l.b16 %v673
    %v1203 = vunpack.c.h.b16 %v673
    %v1204 = vunpack.c.l.b16 %v674
    %v1205 = vunpack.c.h.b16 %v674
    %v1206 = vunpack.c.l.b16 %v675
    %v1207 = vunpack.c.l.b16 %v676
    %v1208 = vunpack.c.h.b16 %v676
    %v1209 = vunpack.c.l.b16 %v677
    %v1210 = vunpack.c.h.b16 %v677
    %v1211 = vunpack.c.l.b16 %v678
    %v1212 = vunpack.c.h.b16 %v678
    %v1213 = vunpack.c.l.b16 %v679
    %v1214 = vunpack.c.l.b16 %v680
    %v1215 = vunpack.c.h.b16 %v680
    %v1216 = vunpack.c.l.b16 %v681
    %v1217 = vunpack.c.h.b16 %v681
    %v1218 = vunpack.c.l.b16 %v682
    %v1219 = vunpack.c.h.b16 %v682
    %v1220 = vunpack.c.l.b16 %v683
    %v1221 = vunpack.c.l.b16 %v684
    %v1222 = vunpack.c.h.b16 %v684
    %v1223 = vunpack.c.l.b16 %v685
    %v1224 = vunpack.c.h.b16 %v685
    %v1225 = vunpack.c.l.b16 %v686
    %v1226 = vunpack.c.h.b16 %v686
    %v1227 = vunpack.c.l.b16 %v687
    %v1228 = vunpack.c.l.b16 %v688
    %v1229 = vunpack.c.h.b16 %v688
    %v1230 = vunpack.c.l.b16 %v689
    %v1231 = vunpack.c.h.b16 %v689
    %v1232 = vunpack.c.l.b16 %v690
    %v1233 = vunpack.c.h.b16 %v690
    %v1234 = vunpack.c.l.b16 %v691
    %v1235 = vunpack.c.l.b16 %v692
    %v1236 = vunpack.c.h.b16 %v692
    %v1237 = vunpack.c.l.b16 %v693
    %v1238 = vunpack.c.h.b16 %v693
    %v1239 = vunpack.c.l.b16 %v694
    %v1240 = vunpack.c.h.b16 %v694
    %v1241 = vunpack.c.l.b16 %v695
    %v1242 = vunpack.c.l.b16 %v696
    %v1243 = vunpack.c.h.b16 %v696
    %v1244 = vunpack.c.l.b16 %v697
    %v1245 = vunpack.c.h.b16 %v697
    %v1246 = vunpack.c.l.b16 %v698
    %v1247 = vunpack.c.h.b16 %v698
    %v1248 = vunpack.c.l.b16 %v699
    %v1249 = vunpack.c.l.b16 %v700
    %v1250 = vunpack.c.h.b16 %v700
    %v1251 = vunpack.c.l.b16 %v701
    %v1252 = vunpack.c.h.b16 %v701
    %v1253 = vunpack.c.l.b16 %v702
    %v1254 = vunpack.c.h.b16 %v702
    %v1255 = vunpack.c.l.b16 %v703
    %v1256 = vunpack.c.l.b16 %v704
    %v1257 = vunpack.c.h.b16 %v704
    %v1258 = vunpack.c.l.b16 %v705
    %v1259 = vunpack.c.h.b16 %v705
    %v1260 = vunpack.c.l.b16 %v706
    %v1261 = vunpack.c.h.b16 %v706
    %v1262 = vunpack.c.l.b16 %v707
    %v1263 = vunpack.c.l.b16 %v708
    %v1264 = vunpack.c.h.b16 %v708
    %v1265 = vunpack.c.l.b16 %v709
    %v1266 = vunpack.c.h.b16 %v709
    %v1267 = vunpack.c.l.b16 %v710
    %v1268 = vunpack.c.h.b16 %v710
    %v1269 = vunpack.c.l.b16 %v711
    %v1270 = vunpack.c.l.b16 %v712
    %v1271 = vunpack.c.h.b16 %v712
    %v1272 = vunpack.c.l.b16 %v713
    %v1273 = vunpack.c.h.b16 %v713
    %v1274 = vunpack.c.l.b16 %v714
    %v1275 = vunpack.c.h.b16 %v714
    %v1276 = vunpack.c.l.b16 %v715
    %v1277 = vunpack.c.l.b16 %v716
    %v1278 = vunpack.c.h.b16 %v716
    %v1279 = vunpack.c.l.b16 %v717
    %v1280 = vunpack.c.h.b16 %v717
    %v1281 = vunpack.c.l.b16 %v718
    %v1282 = vunpack.c.h.b16 %v718
    %v1283 = vunpack.c.l.b16 %v719
    %v1284 = vunpack.c.l.b16 %v720
    %v1285 = vunpack.c.h.b16 %v720
    %v1286 = vunpack.c.l.b16 %v721
    %v1287 = vunpack.c.h.b16 %v721
    %v1288 = vunpack.c.l.b16 %v722
    %v1289 = vunpack.c.h.b16 %v722
    %v1290 = vunpack.c.l.b16 %v723
    %v1291 = vunpack.c.l.b16 %v724
    %v1292 = vunpack.c.h.b16 %v724
    %v1293 = vunpack.c.l.b16 %v725
    %v1294 = vunpack.c.h.b16 %v725
    %v1295 = vunpack.c.l.b16 %v726
    %v1296 = vunpack.c.h.b16 %v726
    %v1297 = vunpack.c.l.b16 %v727
    %v1298 = vunpack.c.l.b16 %v728
    %v1299 = vunpack.c.h.b16 %v728
    %v1300 = vunpack.c.l.b16 %v729
    %v1301 = vunpack.c.h.b16 %v729
    %v1302 = vunpack.c.l.b16 %v730
    %v1303 = vunpack.c.h.b16 %v730
    %v1304 = vunpack.c.l.b16 %v731
    %v1305 = vunpack.c.l.b16 %v732
    %v1306 = vunpack.c.h.b16 %v732
    %v1307 = vunpack.c.l.b16 %v733
    %v1308 = vunpack.c.h.b16 %v733
    %v1309 = vunpack.c.l.b16 %v734
    %v1310 = vunpack.c.h.b16 %v734
    %v1311 = vunpack.c.l.b16 %v735
    %v1312 = vunpack.c.l.b16 %v736
    %v1313 = vunpack.c.h.b16 %v736
    %v1314 = vunpack.c.l.b16 %v737
    %v1315 = vunpack.c.h.b16 %v737
    %v1316 = vunpack.c.l.b16 %v738
    %v1317 = vunpack.c.h.b16 %v738
    %v1318 = vunpack.c.l.b16 %v739
    %v1319 = vunpack.c.l.b16 %v740
    %v1320 = vunpack.c.h.b16 %v740
    %v1321 = vunpack.c.l.b16 %v741
    %v1322 = vunpack.c.h.b16 %v741
    %v1323 = vunpack.c.l.b16 %v742
    %v1324 = vunpack.c.h.b16 %v742
    %v1325 = vunpack.c.l.b16 %v743
    %v1326 = vunpack.c.l.b16 %v744
    %v1327 = vunpack.c.h.b16 %v744
    %v1328 = vunpack.c.l.b16 %v745
    %v1329 = vunpack.c.h.b16 %v745
    %v1330 = vunpack.c.l.b16 %v746
    %v1331 = vunpack.c.h.b16 %v746
    %v1332 = vunpack.c.l.b16 %v747
    %v1333 = vunpack.c.l.b16 %v748
    %v1334 = vunpack.c.h.b16 %v748
    %v1335 = vunpack.c.l.b16 %v749
    %v1336 = vunpack.c.h.b16 %v749
    %v1337 = vunpack.c.l.b16 %v750
    %v1338 = vunpack.c.h.b16 %v750
    %v1339 = vunpack.c.l.b16 %v751
    %v1340 = vunpack.c.l.b16 %v752
    %v1341 = vunpack.c.h.b16 %v752
    %v1342 = vunpack.c.l.b16 %v753
    %v1343 = vunpack.c.h.b16 %v753
    %v1344 = vunpack.c.l.b16 %v754
    %v1345 = vunpack.c.h.b16 %v754
    %v1346 = vunpack.c.l.b16 %v755
    %v1347 = vunpack.c.l.b16 %v756
    %v1348 = vunpack.c.h.b16 %v756
    %v1349 = vunpack.c.l.b16 %v757
    %v1350 = vunpack.c.h.b16 %v757
    %v1351 = vunpack.c.l.b16 %v758
    %v1352 = vunpack.c.h.b16 %v758
    %v1353 = vunpack.c.l.b16 %v759
    %v1354 = vunpack.c.l.b16 %v760
    %v1355 = vunpack.c.h.b16 %v760
    %v1356 = vunpack.c.l.b16 %v761
    %v1357 = vunpack.c.h.b16 %v761
    %v1358 = vunpack.c.l.b16 %v762
    %v1359 = vunpack.c.h.b16 %v762
    %v1360 = vunpack.c.l.b16 %v763
    %v1361 = vunpack.c.l.b16 %v764
    %v1362 = vunpack.c.h.b16 %v764
    %v1363 = vunpack.c.l.b16 %v765
    %v1364 = vunpack.c.h.b16 %v765
    %v1365 = vunpack.c.l.b16 %v766
    %v1366 = vunpack.c.h.b16 %v766
    %v1367 = vunpack.c.l.b16 %v767
    %v1368 = vunpack.c.l.b16 %v768
    %v1369 = vunpack.c.h.b16 %v768
    %v1370 = vunpack.c.l.b16 %v769
    %v1371 = vunpack.c.h.b16 %v769
    %v1372 = vunpack.c.l.b16 %v770
    %v1373 = vunpack.c.h.b16 %v770
    %v1374 = vunpack.c.l.b16 %v771
    %v1375 = vunpack.c.l.b16 %v772
    %v1376 = vunpack.c.h.b16 %v772
    %v1377 = vunpack.c.l.b16 %v773
    %v1378 = vunpack.c.h.b16 %v773
    %v1379 = vunpack.c.l.b16 %v774
    %v1380 = vunpack.c.h.b16 %v774
    %v1381 = vunpack.c.l.b16 %v775
    %v1382 = vunpack.c.l.b16 %v776
    %v1383 = vunpack.c.h.b16 %v776
    %v1384 = vunpack.c.l.b16 %v777
    %v1385 = vunpack.c.h.b16 %v777
    %v1386 = vunpack.c.l.b16 %v778
    %v1387 = vunpack.c.h.b16 %v778
    %v1388 = vunpack.c.l.b16 %v779
    %v1389 = vunpack.c.l.b16 %v780
    %v1390 = vunpack.c.h.b16 %v780
    %v1391 = vunpack.c.l.b16 %v781
    %v1392 = vunpack.c.h.b16 %v781
    %v1393 = vunpack.c.l.b16 %v782
    %v1394 = vunpack.c.h.b16 %v782
    %v1395 = vunpack.c.l.b16 %v783
    %v1396 = vunpack.c.l.b16 %v784
    %v1397 = vunpack.c.h.b16 %v784
    %v1398 = vunpack.c.l.b16 %v785
    %v1399 = vunpack.c.h.b16 %v785
    %v1400 = vunpack.c.l.b16 %v786
    %v1401 = vunpack.c.h.b16 %v786
    %v1402 = vunpack.c.l.b16 %v787
    %v1403 = vunpack.c.l.b16 %v788
    %v1404 = vunpack.c.h.b16 %v788
    %v1405 = vunpack.c.l.b16 %v789
    %v1406 = vunpack.c.h.b16 %v789
    %v1407 = vunpack.c.l.b16 %v790
    %v1408 = vunpack.c.h.b16 %v790
    %v1409 = vunpack.c.l.b16 %v791
    %v1410 = vunpack.c.l.b16 %v792
    %v1411 = vunpack.c.h.b16 %v792
    %v1412 = vunpack.c.l.b16 %v793
    %v1413 = vunpack.c.h.b16 %v793
    %v1414 = vunpack.c.l.b16 %v794
    %v1415 = vunpack.c.h.b16 %v794
    %v1416 = vunpack.c.l.b16 %v795
    %v1417 = vunpack.c.l.b16 %v796
    %v1418 = vunpack.c.h.b16 %v796
    %v1419 = vunpack.c.l.b16 %v797
    %v1420 = vunpack.c.h.b16 %v797
    %v1421 = vunpack.c.l.b16 %v798
    %v1422 = vunpack.c.h.b16 %v798
    %v1423 = vunpack.c.l.b16 %v799
    %v1424 = vunpack.c.l.b16 %v800
    %v1425 = vunpack.c.h.b16 %v800
    %v1426 = vunpack.c.l.b16 %v801
    %v1427 = vunpack.c.h.b16 %v801
    %v1428 = vunpack.c.l.b16 %v802
    %v1429 = vunpack.c.h.b16 %v802
    %v1430 = vunpack.c.l.b16 %v803
    %v1431 = vunpack.c.l.b16 %v804
    %v1432 = vunpack.c.h.b16 %v804
    %v1433 = vunpack.c.l.b16 %v805
    %v1434 = vunpack.c.h.b16 %v805
    %v1435 = vunpack.c.l.b16 %v806
    %v1436 = vunpack.c.h.b16 %v806
    %v1437 = vunpack.c.l.b16 %v807
    %v1438 = vunpack.c.l.b16 %v808
    %v1439 = vunpack.c.h.b16 %v808
    %v1440 = vunpack.c.l.b16 %v809
    %v1441 = vunpack.c.h.b16 %v809
    %v1442 = vunpack.c.l.b16 %v810
    %v1443 = vunpack.c.h.b16 %v810
    %v1444 = vunpack.c.l.b16 %v811
    %v1445 = vunpack.c.l.b16 %v812
    %v1446 = vunpack.c.h.b16 %v812
    %v1447 = vunpack.c.l.b16 %v813
    %v1448 = vunpack.c.h.b16 %v813
    %v1449 = vunpack.c.l.b16 %v814
    %v1450 = vunpack.c.h.b16 %v814
    %v1451 = vunpack.c.l.b16 %v815
    %v1452 = vunpack.c.l.b16 %v816
    %v1453 = vunpack.c.h.b16 %v816
    %v1454 = vunpack.c.l.b16 %v817
    %v1455 = vunpack.c.h.b16 %v817
    %v1456 = vunpack.c.l.b16 %v818
    %v1457 = vunpack.c.h.b16 %v818
    %v1458 = vunpack.c.l.b16 %v819
    %v1459 = vunpack.c.l.b16 %v820
    %v1460 = vunpack.c.h.b16 %v820
    %v1461 = vunpack.c.l.b16 %v821
    %v1462 = vunpack.c.h.b16 %v821
    %v1463 = vunpack.c.l.b16 %v822
    %v1464 = vunpack.c.h.b16 %v822
    %v1465 = vunpack.c.l.b16 %v823
    %v1466 = vunpack.c.l.b16 %v824
    %v1467 = vunpack.c.h.b16 %v824
    %v1468 = vunpack.c.l.b16 %v825
    %v1469 = vunpack.c.h.b16 %v825
    %v1470 = vunpack.c.l.b16 %v826
    %v1471 = vunpack.c.h.b16 %v826
    %v1472 = vunpack.c.l.b16 %v827
    %v1473 = vunpack.c.l.b16 %v828
    %v1474 = vunpack.c.h.b16 %v828
    %v1475 = vunpack.c.l.b16 %v829
    %v1476 = vunpack.c.h.b16 %v829
    %v1477 = vunpack.c.l.b16 %v830
    %v1478 = vunpack.c.h.b16 %v830
    %v1479 = vunpack.c.l.b16 %v831
    %v1480 = vunpack.c.l.b16 %v832
    %v1481 = vunpack.c.h.b16 %v832
    %v1482 = vunpack.c.l.b16 %v833
    %v1483 = vunpack.c.h.b16 %v833
    %v1484 = vunpack.c.l.b16 %v834
    %v1485 = vunpack.c.h.b16 %v834
    %v1486 = vunpack.c.l.b16 %v835
    %v1487 = vunpack.c.l.b16 %v836
    %v1488 = vunpack.c.h.b16 %v836
    %v1489 = vunpack.c.l.b16 %v837
    %v1490 = vunpack.c.h.b16 %v837
    %v1491 = vunpack.c.l.b16 %v838
    %v1492 = vunpack.c.h.b16 %v838
    %v1493 = vunpack.c.l.b16 %v839
    %v1494 = vunpack.c.l.b16 %v840
    %v1495 = vunpack.c.h.b16 %v840
    %v1496 = vunpack.c.l.b16 %v841
    %v1497 = vunpack.c.h.b16 %v841
    %v1498 = vunpack.c.l.b16 %v842
    %v1499 = vunpack.c.h.b16 %v842
    %v1500 = vunpack.c.l.b16 %v843
    %v1501 = vunpack.c.l.b16 %v844
    %v1502 = vunpack.c.h.b16 %v844
    %v1503 = vunpack.c.l.b16 %v845
    %v1504 = vunpack.c.h.b16 %v845
    %v1505 = vunpack.c.l.b16 %v846
    %v1506 = vunpack.c.h.b16 %v846
    %v1507 = vunpack.c.l.b16 %v847
    %v1508 = vunpack.c.l.b16 %v848
    %v1509 = vunpack.c.h.b16 %v848
    %v1510 = vunpack.c.l.b16 %v849
    %v1511 = vunpack.c.h.b16 %v849
    %v1512 = vunpack.c.l.b16 %v850
    %v1513 = vunpack.c.h.b16 %v850
    %v1514 = vunpack.c.l.b16 %v851
    %v1515 = vunpack.c.l.b16 %v852
    %v1516 = vunpack.c.h.b16 %v852
    %v1517 = vunpack.c.l.b16 %v853
    %v1518 = vunpack.c.h.b16 %v853
    %v1519 = vunpack.c.l.b16 %v854
    %v1520 = vunpack.c.h.b16 %v854
    %v1521 = vunpack.c.l.b16 %v855
    %v1522 = vunpack.c.l.b16 %v856
    %v1523 = vunpack.c.h.b16 %v856
    %v1524 = vunpack.c.l.b16 %v857
    %v1525 = vunpack.c.h.b16 %v857
    %v1526 = vunpack.c.l.b16 %v858
    %v1527 = vunpack.c.h.b16 %v858
    %v1528 = vunpack.c.l.b16 %v859
    %v1529 = vunpack.c.l.b16 %v860
    %v1530 = vunpack.c.h.b16 %v860
    %v1531 = vunpack.c.l.b16 %v861
    %v1532 = vunpack.c.h.b16 %v861
    %v1533 = vunpack.c.l.b16 %v862
    %v1534 = vunpack.c.h.b16 %v862
    %v1535 = vunpack.c.l.b16 %v863
    %v1536 = vunpack.c.l.b16 %v864
    %v1537 = vunpack.c.h.b16 %v864
    %v1538 = vunpack.c.l.b16 %v865
    %v1539 = vunpack.c.h.b16 %v865
    %v1540 = vunpack.c.l.b16 %v866
    %v1541 = vunpack.c.h.b16 %v866
    %v1542 = vunpack.c.l.b16 %v867
    %v1543 = vunpack.c.l.b16 %v868
    %v1544 = vunpack.c.h.b16 %v868
    %v1545 = vunpack.c.l.b16 %v869
    %v1546 = vunpack.c.h.b16 %v869
    %v1547 = vunpack.c.l.b16 %v870
    %v1548 = vunpack.c.h.b16 %v870
    %v1549 = vunpack.c.l.b16 %v871
    %v1550 = vunpack.c.l.b16 %v872
    %v1551 = vunpack.c.h.b16 %v872
    %v1552 = vunpack.c.l.b16 %v873
    %v1553 = vunpack.c.h.b16 %v873
    %v1554 = vunpack.c.l.b16 %v874
    %v1555 = vunpack.c.h.b16 %v874
    %v1556 = vunpack.c.l.b16 %v875
    %v1557 = vunpack.c.l.b16 %v876
    %v1558 = vunpack.c.h.b16 %v876
    %v1559 = vunpack.c.l.b16 %v877
    %v1560 = vunpack.c.h.b16 %v877
    %v1561 = vunpack.c.l.b16 %v878
    %v1562 = vunpack.c.h.b16 %v878
    %v1563 = vunpack.c.l.b16 %v879
    %v1564 = vunpack.c.l.b16 %v880
    %v1565 = vunpack.c.h.b16 %v880
    %v1566 = vunpack.c.l.b16 %v881
    %v1567 = vunpack.c.h.b16 %v881
    %v1568 = vunpack.c.l.b16 %v882
    %v1569 = vunpack.c.h.b16 %v882
    %v1570 = vunpack.c.l.b16 %v883
    %v1571 = vunpack.c.l.b16 %v884
    %v1572 = vunpack.c.h.b16 %v884
    %v1573 = vunpack.c.l.b16 %v885
    %v1574 = vunpack.c.h.b16 %v885
    %v1575 = vunpack.c.l.b16 %v886
    %v1576 = vunpack.c.h.b16 %v886
    %v1577 = vunpack.c.l.b16 %v887
    %v1578 = vunpack.c.l.b16 %v888
    %v1579 = vunpack.c.h.b16 %v888
    %v1580 = vunpack.c.l.b16 %v889
    %v1581 = vunpack.c.h.b16 %v889
    %v1582 = vunpack.c.l.b16 %v890
    %v1583 = vunpack.c.h.b16 %v890
    %v1584 = vunpack.c.l.b16 %v891
    %v1585 = vunpack.c.l.b16 %v892
    %v1586 = vunpack.c.h.b16 %v892
    %v1587 = vunpack.c.l.b16 %v893
    %v1588 = vunpack.c.h.b16 %v893
    %v1589 = vunpack.c.l.b16 %v894
    %v1590 = vunpack.c.h.b16 %v894
    %v1591 = vunpack.c.l.b16 %v895
    %v1592 = vunpack.c.l.b16 %v896
    %v1593 = vunpack.c.h.b16 %v896
    %v1594 = vunpack.c.l.b16 %v897
    %v1595 = vunpack.c.h.b16 %v897
    %v1596 = vunpack.c.l.b16 %v898
    %v1597 = vunpack.c.h.b16 %v898
    %v1598 = vunpack.c.l.b16 %v899
    %v1599 = vunpack.c.l.b16 %v900
    %v1600 = vunpack.c.h.b16 %v900
    %v1601 = vunpack.c.l.b16 %v901
    %v1602 = vunpack.c.h.b16 %v901
    %v1603 = vunpack.c.l.b16 %v902
    %v1604 = vunpack.c.h.b16 %v902
    %v1605 = vunpack.c.l.b16 %v903
    %v1606 = vunpack.c.l.b16 %v904
    %v1607 = vunpack.c.h.b16 %v904
    %v1608 = vunpack.c.l.b16 %v905
    %v1609 = vunpack.c.h.b16 %v905
    %v1610 = vunpack.c.l.b16 %v906
    %v1611 = vunpack.c.h.b16 %v906
    %v1612 = vunpack.c.l.b16 %v907
    %v1613 = vunpack.c.l.b16 %v908
    %v1614 = vunpack.c.h.b16 %v908
    %v1615 = vunpack.c.l.b16 %v909
    %v1616 = vunpack.c.h.b16 %v909
    %v1617 = vunpack.c.l.b16 %v910
    %v1618 = vunpack.c.h.b16 %v910
    %v1619 = vunpack.c.l.b16 %v911
    %v1620 = vunpack.c.l.b16 %v912
    %v1621 = vunpack.c.h.b16 %v912
    %v1622 = vunpack.c.l.b16 %v913
    %v1623 = vunpack.c.h.b16 %v913
    %v1624 = vunpack.c.l.b16 %v914
    %v1625 = vunpack.c.h.b16 %v914
    %v1626 = vunpack.c.l.b16 %v915
    %v1627 = vunpack.c.l.b16 %v916
    %v1628 = vunpack.c.h.b16 %v916
    %v1629 = vunpack.c.l.b16 %v917
    %v1630 = vunpack.c.h.b16 %v917
    %v1631 = vunpack.c.l.b16 %v918
    %v1632 = vunpack.c.h.b16 %v918
    %v1633 = vunpack.c.l.b16 %v919
    %v1634 = vunpack.c.l.b16 %v920
    %v1635 = vunpack.c.h.b16 %v920
    %v1636 = vunpack.c.l.b16 %v921
    %v1637 = vunpack.c.h.b16 %v921
    %v1638 = vunpack.c.l.b16 %v922
    %v1639 = vunpack.c.h.b16 %v922
    %v1640 = vunpack.c.l.b16 %v923
    %v1641 = vunpack.c.l.b16 %v924
    %v1642 = vunpack.c.h.b16 %v924
    %v1643 = vunpack.c.l.b16 %v925
    %v1644 = vunpack.c.h.b16 %v925
    %v1645 = vunpack.c.l.b16 %v926
    %v1646 = vunpack.c.h.b16 %v926
    %v1647 = vunpack.c.l.b16 %v927
    %v1648 = vpack.c.b16 %v1207, %v1200
    %v1649 = vpack.c.b16 %v1208, %v1201
    %v1650 = vpack.c.b16 %v1209, %v1202
    %v1651 = vpack.c.b16 %v1210, %v1203
    %v1652 = vpack.c.b16 %v1211, %v1204
    %v1653 = vpack.c.b16 %v1212, %v1205
    %v1654 = vpack.c.b16 %v1213, %v1206
    %v1655 = vpack.c.b16 %v1221, %v1214
    %v1656 = vpack.c.b16 %v1222, %v1215
    %v1657 = vpack.c.b16 %v1223, %v1216
    %v1658 = vpack.c.b16 %v1224, %v1217
    %v1659 = vpack.c.b16 %v1225, %v1218
    %v1660 = vpack.c.b16 %v1226, %v1219
    %v1661 = vpack.c.b16 %v1227, %v1220
    %v1662 = vpack.c.b16 %v1235, %v1228
    %v1663 = vpack.c.b16 %v1236, %v1229
    %v1664 = vpack.c.b16 %v1237, %v1230
    %v1665 = vpack.c.b16 %v1238, %v1231
    %v1666 = vpack.c.b16 %v1239, %v1232
    %v1667 = vpack.c.b16 %v1240, %v1233
    %v1668 = vpack.c.b16 %v1241, %v1234
    %v1669 = vpack.c.b16 %v1249, %v1242
    %v1670 = vpack.c.b16 %v1250, %v1243
    %v1671 = vpack.c.b16 %v1251, %v1244
    %v1672 = vpack.c.b16 %v1252, %v1245
    %v1673 = vpack.c.b16 %v1253, %v1246
    %v1674 = vpack.c.b16 %v1254, %v1247
    %v1675 = vpack.c.b16 %v1255, %v1248
    %v1676 = vpack.c.b16 %v1263, %v1256
    %v1677 = vpack.c.b16 %v1264, %v1257
    %v1678 = vpack.c.b16 %v1265, %v1258
    %v1679 = vpack.c.b16 %v1266, %v1259
    %v1680 = vpack.c.b16 %v1267, %v1260
    %v1681 = vpack.c.b16 %v1268, %v1261
    %v1682 = vpack.c.b16 %v1269, %v1262
    %v1683 = vpack.c.b16 %v1277, %v1270
    %v1684 = vpack.c.b16 %v1278, %v1271
    %v1685 = vpack.c.b16 %v1279, %v1272
    %v1686 = vpack.c.b16 %v1280, %v1273
    %v1687 = vpack.c.b16 %v1281, %v1274
    %v1688 = vpack.c.b16 %v1282, %v1275
    %v1689 = vpack.c.b16 %v1283, %v1276
    %v1690 = vpack.c.b16 %v1291, %v1284
    %v1691 = vpack.c.b16 %v1292, %v1285
    %v1692 = vpack.c.b16 %v1293, %v1286
    %v1693 = vpack.c.b16 %v1294, %v1287
    %v1694 = vpack.c.b16 %v1295, %v1288
    %v1695 = vpack.c.b16 %v1296, %v1289
    %v1696 = vpack.c.b16 %v1297, %v1290
    %v1697 = vpack.c.b16 %v1305, %v1298
    %v1698 = vpack.c.b16 %v1306, %v1299
    %v1699 = vpack.c.b16 %v1307, %v1300
    %v1700 = vpack.c.b16 %v1308, %v1301
    %v1701 = vpack.c.b16 %v1309, %v1302
    %v1702 = vpack.c.b16 %v1310, %v1303
    %v1703 = vpack.c.b16 %v1311, %v1304
    %v1704 = vpack.c.b16 %v1319, %v1312
    %v1705 = vpack.c.b16 %v1320, %v1313
    %v1706 = vpack.c.b16 %v1321, %v1314
    %v1707 = vpack.c.b16 %v1322, %v1315
    %v1708 = vpack.c.b16 %v1323, %v1316
    %v1709 = vpack.c.b16 %v1324, %v1317
    %v1710 = vpack.c.b16 %v1325, %v1318
    %v1711 = vpack.c.b16 %v1333, %v1326
    %v1712 = vpack.c.b16 %v1334, %v1327
    %v1713 = vpack.c.b16 %v1335, %v1328
    %v1714 = vpack.c.b16 %v1336, %v1329
    %v1715 = vpack.c.b16 %v1337, %v1330
    %v1716 = vpack.c.b16 %v1338, %v1331
    %v1717 = vpack.c.b16 %v1339, %v1332
    %v1718 = vpack.c.b16 %v1347, %v1340
    %v1719 = vpack.c.b16 %v1348, %v1341
    %v1720 = vpack.c.b16 %v1349, %v1342
    %v1721 = vpack.c.b16 %v1350, %v1343
    %v1722 = vpack.c.b16 %v1351, %v1344
    %v1723 = vpack.c.b16 %v1352, %v1345
    %v1724 = vpack.c.b16 %v1353, %v1346
    %v1725 = vpack.c.b16 %v1361, %v1354
    %v1726 = vpack.c.b16 %v1362, %v1355
    %v1727 = vpack.c.b16 %v1363, %v1356
    %v1728 = vpack.c.b16 %v1364, %v1357
    %v1729 = vpack.c.b16 %v1365, %v1358
    %v1730 = vpack.c.b16 %v1366, %v1359
    %v1731 = vpack.c.b16 %v1367, %v1360
    %v1732 = vpack.c.b16 %v1375, %v1368
    %v1733 = vpack.c.b16 %v1376, %v1369
    %v1734 = vpack.c.b16 %v1377, %v1370
    %v1735 = vpack.c.b16 %v1378, %v1371
    %v1736 = vpack.c.b16 %v1379, %v1372
    %v1737 = vpack.c.b16 %v1380, %v1373
    %v1738 = vpack.c.b16 %v1381, %v1374
    %v1739 = vpack.c.b16 %v1389, %v1382
    %v1740 = vpack.c.b16 %v1390, %v1383
    %v1741 = vpack.c.b16 %v1391, %v1384
    %v1742 = vpack.c.b16 %v1392, %v1385
    %v1743 = vpack.c.b16 %v1393, %v1386
    %v1744 = vpack.c.b16 %v1394, %v1387
    %v1745 = vpack.c.b16 %v1395, %v1388
    %v1746 = vpack.c.b16 %v1403, %v1396
    %v1747 = vpack.c.b16 %v1404, %v1397
    %v1748 = vpack.c.b16 %v1405, %v1398
    %v1749 = vpack.c.b16 %v1406, %v1399
    %v1750 = vpack.c.b16 %v1407, %v1400
    %v1751 = vpack.c.b16 %v1408, %v1401
    %v1752 = vpack.c.b16 %v1409, %v1402
    %v1753 = vpack.c.b16 %v1417, %v1410
    %v1754 = vpack.c.b16 %v1418, %v1411
    %v1755 = vpack.c.b16 %v1419, %v1412
    %v1756 = vpack.c.b16 %v1420, %v1413
    %v1757 = vpack.c.b16 %v1421, %v1414
    %v1758 = vpack.c.b16 %v1422, %v1415
    %v1759 = vpack.c.b16 %v1423, %v1416
    %v1760 = vpack.c.b16 %v1431, %v1424
    %v1761 = vpack.c.b16 %v1432, %v1425
    %v1762 = vpack.c.b16 %v1433, %v1426
    %v1763 = vpack.c.b16 %v1434, %v1427
    %v1764 = vpack.c.b16 %v1435, %v1428
    %v1765 = vpack.c.b16 %v1436, %v1429
    %v1766 = vpack.c.b16 %v1437, %v1430
    %v1767 = vpack.c.b16 %v1445, %v1438
    %v1768 = vpack.c.b16 %v1446, %v1439
    %v1769 = vpack.c.b16 %v1447, %v1440
    %v1770 = vpack.c.b16 %v1448, %v1441
    %v1771 = vpack.c.b16 %v1449, %v1442
    %v1772 = vpack.c.b16 %v1450, %v1443
    %v1773 = vpack.c.b16 %v1451, %v1444
    %v1774 = vpack.c.b16 %v1459, %v1452
    %v1775 = vpack.c.b16 %v1460, %v1453
    %v1776 = vpack.c.b16 %v1461, %v1454
    %v1777 = vpack.c.b16 %v1462, %v1455
    %v1778 = vpack.c.b16 %v1463, %v1456
    %v1779 = vpack.c.b16 %v1464, %v1457
    %v1780 = vpack.c.b16 %v1465, %v1458
    %v1781 = vpack.c.b16 %v1473, %v1466
    %v1782 = vpack.c.b16 %v1474, %v1467
    %v1783 = vpack.c.b16 %v1475, %v1468
    %v1784 = vpack.c.b16 %v1476, %v1469
    %v1785 = vpack.c.b16 %v1477, %v1470
    %v1786 = vpack.c.b16 %v1478, %v1471
    %v1787 = vpack.c.b16 %v1479, %v1472
    %v1788 = vpack.c.b16 %v1487, %v1480
    %v1789 = vpack.c.b16 %v1488, %v1481
    %v1790 = vpack.c.b16 %v1489, %v1482
    %v1791 = vpack.c.b16 %v1490, %v1483
    %v1792 = vpack.c.b16 %v1491, %v1484
    %v1793 = vpack.c.b16 %v1492, %v1485
    %v1794 = vpack.c.b16 %v1493, %v1486
    %v1795 = vpack.c.b16 %v1501, %v1494
    %v1796 = vpack.c.b16 %v1502, %v1495
    %v1797 = vpack.c.b16 %v1503, %v1496
    %v1798 = vpack.c.b16 %v1504, %v1497
    %v1799 = vpack.c.b16 %v1505, %v1498
    %v1800 = vpack.c.b16 %v1506, %v1499
    %v1801 = vpack.c.b16 %v1507, %v1500
    %v1802 = vpack.c.b16 %v1515, %v1508
    %v1803 = vpack.c.b16 %v1516, %v1509
    %v1804 = vpack.c.b16 %v1517, %v1510
    %v1805 = vpack.c.b16 %v1518, %v1511
    %v1806 = vpack.c.b16 %v1519, %v1512
    %v1807 = vpack.c.b16 %v1520, %v1513
    %v1808 = vpack.c.b16 %v1521, %v1514
    %v1809 = vpack.c.b16 %v1529, %v1522
    %v1810 = vpack.c.b16 %v1530, %v1523
    %v1811 = vpack.c.b16 %v1531, %v1524
    %v1812 = vpack.c.b16 %v1532, %v1525
    %v1813 = vpack.c.b16 %v1533, %v1526
    %v1814 = vpack.c.b16 %v1534, %v1527
    %v1815 = vpack.c.b16 %v1535, %v1528
    %v1816 = vpack.c.b16 %v1543, %v1536
    %v1817 = vpack.c.b16 %v1544, %v1537
    %v1818 = vpack.c.b16 %v1545, %v1538
    %v1819 = vpack.c.b16 %v1546, %v1539
    %v1820 = vpack.c.b16 %v1547, %v1540
    %v1821 = vpack.c.b16 %v1548, %v1541
    %v1822 = vpack.c.b16 %v1549, %v1542
    %v1823 = vpack.c.b16 %v1557, %v1550
    %v1824 = vpack.c.b16 %v1558, %v1551
    %v1825 = vpack.c.b16 %v1559, %v1552
    %v1826 = vpack.c.b16 %v1560, %v1553
    %v1827 = vpack.c.b16 %v1561, %v1554
    %v1828 = vpack.c.b16 %v1562, %v1555
    %v1829 = vpack.c.b16 %v1563, %v1556
    %v1830 = vpack.c.b16 %v1571, %v1564
    %v1831 = vpack.c.b16 %v1572, %v1565
    %v1832 = vpack.c.b16 %v1573, %v1566
    %v1833 = vpack.c.b16 %v1574, %v1567
    %v1834 = vpack.c.b16 %v1575, %v1568
    %v1835 = vpack.c.b16 %v1576, %v1569
    %v1836 = vpack.c.b16 %v1577, %v1570
    %v1837 = vpack.c.b16 %v1585, %v1578
    %v1838 = vpack.c.b16 %v1586, %v1579
    %v1839 = vpack.c.b16 %v1587, %v1580
    %v1840 = vpack.c.b16 %v1588, %v1581
    %v1841 = vpack.c.b16 %v1589, %v1582
    %v1842 = vpack.c.b16 %v1590, %v1583
    %v1843 = vpack.c.b16 %v1591, %v1584
    %v1844 = vpack.c.b16 %v1599, %v1592
    %v1845 = vpack.c.b16 %v1600, %v1593
    %v1846 = vpack.c.b16 %v1601, %v1594
    %v1847 = vpack.c.b16 %v1602, %v1595
    %v1848 = vpack.c.b16 %v1603, %v1596
    %v1849 = vpack.c.b16 %v1604, %v1597
    %v1850 = vpack.c.b16 %v1605, %v1598
    %v1851 = vpack.c.b16 %v1613, %v1606
    %v1852 = vpack.c.b16 %v1614, %v1607
    %v1853 = vpack.c.b16 %v1615, %v1608
    %v1854 = vpack.c.b16 %v1616, %v1609
    %v1855 = vpack.c.b16 %v1617, %v1610
    %v1856 = vpack.c.b16 %v1618, %v1611
    %v1857 = vpack.c.b16 %v1619, %v1612
    %v1858 = vpack.c.b16 %v1627, %v1620
    %v1859 = vpack.c.b16 %v1628, %v1621
    %v1860 = vpack.c.b16 %v1629, %v1622
    %v1861 = vpack.c.b16 %v1630, %v1623
    %v1862 = vpack.c.b16 %v1631, %v1624
    %v1863 = vpack.c.b16 %v1632, %v1625
    %v1864 = vpack.c.b16 %v1633, %v1626
    %v1865 = vpack.c.b16 %v1641, %v1634
    %v1866 = vpack.c.b16 %v1642, %v1635
    %v1867 = vpack.c.b16 %v1643, %v1636
    %v1868 = vpack.c.b16 %v1644, %v1637
    %v1869 = vpack.c.b16 %v1645, %v1638
    %v1870 = vpack.c.b16 %v1646, %v1639
    %v1871 = vpack.c.b16 %v1647, %v1640
    %2096 = vmatpush.bf16.msra.mxu0 %v1697
    %2097 = vmatpush.bf16.msra.mxu0 %v1690
    %2098 = vmatpush.bf16.msra.mxu0 %v1683
    %2099 = vmatpush.bf16.msra.mxu0 %v1676
    %2100 = vmatpush.bf16.msra.mxu0 %v1669
    %2101 = vmatpush.bf16.msra.mxu0 %v1662
    %2102 = vmatpush.bf16.msra.mxu0 %v1655
    %2103 = vmatpush.bf16.msra.mxu0 %v1648
    %2104 = vmatmul.bf16.gmra.mxu0 %v668
    %v2105 = vpop.f32.mrf.mxu0
    %v2106 = vadd.f32 %v930, %v2105
    %v2107 = vpop.f32.mrf.mxu0
    %2108 = vdwg.mxu0
    %2109 = vmatpush.bf16.msra.mxu0 %v1753
    %2110 = vmatpush.bf16.msra.mxu0 %v1746
    %2111 = vmatpush.bf16.msra.mxu0 %v1739
    %2112 = vmatpush.bf16.msra.mxu0 %v1732
    %2113 = vmatpush.bf16.msra.mxu0 %v1725
    %2114 = vmatpush.bf16.msra.mxu0 %v1718
    %2115 = vmatpush.bf16.msra.mxu0 %v1711
    %2116 = vmatpush.bf16.msra.mxu0 %v1704
    %2117 = vmatmul.bf16.gmra.mxu0 %v669
    %v2118 = vpop.f32.mrf.mxu0
    %v2119 = vadd.f32 %v2106, %v2118
    %v2120 = vpop.f32.mrf.mxu0
    %2121 = vdwg.mxu0
    %2122 = vmatpush.bf16.msra.mxu0 %v1809
    %2123 = vmatpush.bf16.msra.mxu0 %v1802
    %2124 = vmatpush.bf16.msra.mxu0 %v1795
    %2125 = vmatpush.bf16.msra.mxu0 %v1788
    %2126 = vmatpush.bf16.msra.mxu0 %v1781
    %2127 = vmatpush.bf16.msra.mxu0 %v1774
    %2128 = vmatpush.bf16.msra.mxu0 %v1767
    %2129 = vmatpush.bf16.msra.mxu0 %v1760
    %2130 = vmatmul.bf16.gmra.mxu0 %v670
    %v2131 = vpop.f32.mrf.mxu0
    %v2132 = vadd.f32 %v2119, %v2131
    %v2133 = vpop.f32.mrf.mxu0
    %2134 = vdwg.mxu0
    %2135 = vmatpush.bf16.msra.mxu0 %v1865
    %2136 = vmatpush.bf16.msra.mxu0 %v1858
    %2137 = vmatpush.bf16.msra.mxu0 %v1851
    %2138 = vmatpush.bf16.msra.mxu0 %v1844
    %2139 = vmatpush.bf16.msra.mxu0 %v1837
    %2140 = vmatpush.bf16.msra.mxu0 %v1830
    %2141 = vmatpush.bf16.msra.mxu0 %v1823
    %2142 = vmatpush.bf16.msra.mxu0 %v1816
    %2143 = vmatmul.bf16.gmra.mxu0 %v671
    %v2144 = vpop.f32.mrf.mxu0
    %v2145 = vadd.f32 %v2132, %v2144
    %v2146 = vpop.f32.mrf.mxu0
    %2147 = vdwg.mxu0
    %2148 = vmatpush.bf16.msra.mxu0 %v1698
    %2149 = vmatpush.bf16.msra.mxu0 %v1691
    %2150 = vmatpush.bf16.msra.mxu0 %v1684
    %2151 = vmatpush.bf16.msra.mxu0 %v1677
    %2152 = vmatpush.bf16.msra.mxu0 %v1670
    %2153 = vmatpush.bf16.msra.mxu0 %v1663
    %2154 = vmatpush.bf16.msra.mxu0 %v1656
    %2155 = vmatpush.bf16.msra.mxu0 %v1649
    %2156 = vmatmul.bf16.gmra.mxu0 %v668
    %v2157 = vpop.f32.mrf.mxu0
    %v2158 = vadd.f32 %v931, %v2157
    %v2159 = vpop.f32.mrf.mxu0
    %2160 = vdwg.mxu0
    %2161 = vmatpush.bf16.msra.mxu0 %v1754
    %2162 = vmatpush.bf16.msra.mxu0 %v1747
    %2163 = vmatpush.bf16.msra.mxu0 %v1740
    %2164 = vmatpush.bf16.msra.mxu0 %v1733
    %2165 = vmatpush.bf16.msra.mxu0 %v1726
    %2166 = vmatpush.bf16.msra.mxu0 %v1719
    %2167 = vmatpush.bf16.msra.mxu0 %v1712
    %2168 = vmatpush.bf16.msra.mxu0 %v1705
    %2169 = vmatmul.bf16.gmra.mxu0 %v669
    %v2170 = vpop.f32.mrf.mxu0
    %v2171 = vadd.f32 %v2158, %v2170
    %v2172 = vpop.f32.mrf.mxu0
    %2173 = vdwg.mxu0
    %2174 = vmatpush.bf16.msra.mxu0 %v1810
    %2175 = vmatpush.bf16.msra.mxu0 %v1803
    %2176 = vmatpush.bf16.msra.mxu0 %v1796
    %2177 = vmatpush.bf16.msra.mxu0 %v1789
    %2178 = vmatpush.bf16.msra.mxu0 %v1782
    %2179 = vmatpush.bf16.msra.mxu0 %v1775
    %2180 = vmatpush.bf16.msra.mxu0 %v1768
    %2181 = vmatpush.bf16.msra.mxu0 %v1761
    %2182 = vmatmul.bf16.gmra.mxu0 %v670
    %v2183 = vpop.f32.mrf.mxu0
    %v2184 = vadd.f32 %v2171, %v2183
    %v2185 = vpop.f32.mrf.mxu0
    %2186 = vdwg.mxu0
    %2187 = vmatpush.bf16.msra.mxu0 %v1866
    %2188 = vmatpush.bf16.msra.mxu0 %v1859
    %2189 = vmatpush.bf16.msra.mxu0 %v1852
    %2190 = vmatpush.bf16.msra.mxu0 %v1845
    %2191 = vmatpush.bf16.msra.mxu0 %v1838
    %2192 = vmatpush.bf16.msra.mxu0 %v1831
    %2193 = vmatpush.bf16.msra.mxu0 %v1824
    %2194 = vmatpush.bf16.msra.mxu0 %v1817
    %2195 = vmatmul.bf16.gmra.mxu0 %v671
    %v2196 = vpop.f32.mrf.mxu0
    %v2197 = vadd.f32 %v2184, %v2196
    %v2198 = vpop.f32.mrf.mxu0
    %2199 = vdwg.mxu0
    %2200 = vmatpush.bf16.msra.mxu0 %v1699
    %2201 = vmatpush.bf16.msra.mxu0 %v1692
    %2202 = vmatpush.bf16.msra.mxu0 %v1685
    %2203 = vmatpush.bf16.msra.mxu0 %v1678
    %2204 = vmatpush.bf16.msra.mxu0 %v1671
    %2205 = vmatpush.bf16.msra.mxu0 %v1664
    %2206 = vmatpush.bf16.msra.mxu0 %v1657
    %2207 = vmatpush.bf16.msra.mxu0 %v1650
    %2208 = vmatmul.bf16.gmra.mxu0 %v668
    %v2209 = vpop.f32.mrf.mxu0
    %v2210 = vadd.f32 %v932, %v2209
    %v2211 = vpop.f32.mrf.mxu0
    %2212 = vdwg.mxu0
    %2213 = vmatpush.bf16.msra.mxu0 %v1755
    %2214 = vmatpush.bf16.msra.mxu0 %v1748
    %2215 = vmatpush.bf16.msra.mxu0 %v1741
    %2216 = vmatpush.bf16.msra.mxu0 %v1734
    %2217 = vmatpush.bf16.msra.mxu0 %v1727
    %2218 = vmatpush.bf16.msra.mxu0 %v1720
    %2219 = vmatpush.bf16.msra.mxu0 %v1713
    %2220 = vmatpush.bf16.msra.mxu0 %v1706
    %2221 = vmatmul.bf16.gmra.mxu0 %v669
    %v2222 = vpop.f32.mrf.mxu0
    %v2223 = vadd.f32 %v2210, %v2222
    %v2224 = vpop.f32.mrf.mxu0
    %2225 = vdwg.mxu0
    %2226 = vmatpush.bf16.msra.mxu0 %v1811
    %2227 = vmatpush.bf16.msra.mxu0 %v1804
    %2228 = vmatpush.bf16.msra.mxu0 %v1797
    %2229 = vmatpush.bf16.msra.mxu0 %v1790
    %2230 = vmatpush.bf16.msra.mxu0 %v1783
    %2231 = vmatpush.bf16.msra.mxu0 %v1776
    %2232 = vmatpush.bf16.msra.mxu0 %v1769
    %2233 = vmatpush.bf16.msra.mxu0 %v1762
    %2234 = vmatmul.bf16.gmra.mxu0 %v670
    %v2235 = vpop.f32.mrf.mxu0
    %v2236 = vadd.f32 %v2223, %v2235
    %v2237 = vpop.f32.mrf.mxu0
    %2238 = vdwg.mxu0
    %2239 = vmatpush.bf16.msra.mxu0 %v1867
    %2240 = vmatpush.bf16.msra.mxu0 %v1860
    %2241 = vmatpush.bf16.msra.mxu0 %v1853
    %2242 = vmatpush.bf16.msra.mxu0 %v1846
    %2243 = vmatpush.bf16.msra.mxu0 %v1839
    %2244 = vmatpush.bf16.msra.mxu0 %v1832
    %2245 = vmatpush.bf16.msra.mxu0 %v1825
    %2246 = vmatpush.bf16.msra.mxu0 %v1818
    %2247 = vmatmul.bf16.gmra.mxu0 %v671
    %v2248 = vpop.f32.mrf.mxu0
    %v2249 = vadd.f32 %v2236, %v2248
    %v2250 = vpop.f32.mrf.mxu0
    %2251 = vdwg.mxu0
    %2252 = vmatpush.bf16.msra.mxu0 %v1700
    %2253 = vmatpush.bf16.msra.mxu0 %v1693
    %2254 = vmatpush.bf16.msra.mxu0 %v1686
    %2255 = vmatpush.bf16.msra.mxu0 %v1679
    %2256 = vmatpush.bf16.msra.mxu0 %v1672
    %2257 = vmatpush.bf16.msra.mxu0 %v1665
    %2258 = vmatpush.bf16.msra.mxu0 %v1658
    %2259 = vmatpush.bf16.msra.mxu0 %v1651
    %2260 = vmatmul.bf16.gmra.mxu0 %v668
    %v2261 = vpop.f32.mrf.mxu0
    %v2262 = vadd.f32 %v933, %v2261
    %v2263 = vpop.f32.mrf.mxu0
    %2264 = vdwg.mxu0
    %2265 = vmatpush.bf16.msra.mxu0 %v1756
    %2266 = vmatpush.bf16.msra.mxu0 %v1749
    %2267 = vmatpush.bf16.msra.mxu0 %v1742
    %2268 = vmatpush.bf16.msra.mxu0 %v1735
    %2269 = vmatpush.bf16.msra.mxu0 %v1728
    %2270 = vmatpush.bf16.msra.mxu0 %v1721
    %2271 = vmatpush.bf16.msra.mxu0 %v1714
    %2272 = vmatpush.bf16.msra.mxu0 %v1707
    %2273 = vmatmul.bf16.gmra.mxu0 %v669
    %v2274 = vpop.f32.mrf.mxu0
    %v2275 = vadd.f32 %v2262, %v2274
    %v2276 = vpop.f32.mrf.mxu0
    %2277 = vdwg.mxu0
    %2278 = vmatpush.bf16.msra.mxu0 %v1812
    %2279 = vmatpush.bf16.msra.mxu0 %v1805
    %2280 = vmatpush.bf16.msra.mxu0 %v1798
    %2281 = vmatpush.bf16.msra.mxu0 %v1791
    %2282 = vmatpush.bf16.msra.mxu0 %v1784
    %2283 = vmatpush.bf16.msra.mxu0 %v1777
    %2284 = vmatpush.bf16.msra.mxu0 %v1770
    %2285 = vmatpush.bf16.msra.mxu0 %v1763
    %2286 = vmatmul.bf16.gmra.mxu0 %v670
    %v2287 = vpop.f32.mrf.mxu0
    %v2288 = vadd.f32 %v2275, %v2287
    %v2289 = vpop.f32.mrf.mxu0
    %2290 = vdwg.mxu0
    %2291 = vmatpush.bf16.msra.mxu0 %v1868
    %2292 = vmatpush.bf16.msra.mxu0 %v1861
    %2293 = vmatpush.bf16.msra.mxu0 %v1854
    %2294 = vmatpush.bf16.msra.mxu0 %v1847
    %2295 = vmatpush.bf16.msra.mxu0 %v1840
    %2296 = vmatpush.bf16.msra.mxu0 %v1833
    %2297 = vmatpush.bf16.msra.mxu0 %v1826
    %2298 = vmatpush.bf16.msra.mxu0 %v1819
    %2299 = vmatmul.bf16.gmra.mxu0 %v671
    %v2300 = vpop.f32.mrf.mxu0
    %v2301 = vadd.f32 %v2288, %v2300
    %v2302 = vpop.f32.mrf.mxu0
    %2303 = vdwg.mxu0
    %2304 = vmatpush.bf16.msra.mxu0 %v1701
    %2305 = vmatpush.bf16.msra.mxu0 %v1694
    %2306 = vmatpush.bf16.msra.mxu0 %v1687
    %2307 = vmatpush.bf16.msra.mxu0 %v1680
    %2308 = vmatpush.bf16.msra.mxu0 %v1673
    %2309 = vmatpush.bf16.msra.mxu0 %v1666
    %2310 = vmatpush.bf16.msra.mxu0 %v1659
    %2311 = vmatpush.bf16.msra.mxu0 %v1652
    %2312 = vmatmul.bf16.gmra.mxu0 %v668
    %v2313 = vpop.f32.mrf.mxu0
    %v2314 = vadd.f32 %v934, %v2313
    %v2315 = vpop.f32.mrf.mxu0
    %2316 = vdwg.mxu0
    %2317 = vmatpush.bf16.msra.mxu0 %v1757
    %2318 = vmatpush.bf16.msra.mxu0 %v1750
    %2319 = vmatpush.bf16.msra.mxu0 %v1743
    %2320 = vmatpush.bf16.msra.mxu0 %v1736
    %2321 = vmatpush.bf16.msra.mxu0 %v1729
    %2322 = vmatpush.bf16.msra.mxu0 %v1722
    %2323 = vmatpush.bf16.msra.mxu0 %v1715
    %2324 = vmatpush.bf16.msra.mxu0 %v1708
    %2325 = vmatmul.bf16.gmra.mxu0 %v669
    %v2326 = vpop.f32.mrf.mxu0
    %v2327 = vadd.f32 %v2314, %v2326
    %v2328 = vpop.f32.mrf.mxu0
    %2329 = vdwg.mxu0
    %2330 = vmatpush.bf16.msra.mxu0 %v1813
    %2331 = vmatpush.bf16.msra.mxu0 %v1806
    %2332 = vmatpush.bf16.msra.mxu0 %v1799
    %2333 = vmatpush.bf16.msra.mxu0 %v1792
    %2334 = vmatpush.bf16.msra.mxu0 %v1785
    %2335 = vmatpush.bf16.msra.mxu0 %v1778
    %2336 = vmatpush.bf16.msra.mxu0 %v1771
    %2337 = vmatpush.bf16.msra.mxu0 %v1764
    %2338 = vmatmul.bf16.gmra.mxu0 %v670
    %v2339 = vpop.f32.mrf.mxu0
    %v2340 = vadd.f32 %v2327, %v2339
    %v2341 = vpop.f32.mrf.mxu0
    %2342 = vdwg.mxu0
    %2343 = vmatpush.bf16.msra.mxu0 %v1869
    %2344 = vmatpush.bf16.msra.mxu0 %v1862
    %2345 = vmatpush.bf16.msra.mxu0 %v1855
    %2346 = vmatpush.bf16.msra.mxu0 %v1848
    %2347 = vmatpush.bf16.msra.mxu0 %v1841
    %2348 = vmatpush.bf16.msra.mxu0 %v1834
    %2349 = vmatpush.bf16.msra.mxu0 %v1827
    %2350 = vmatpush.bf16.msra.mxu0 %v1820
    %2351 = vmatmul.bf16.gmra.mxu0 %v671
    %v2352 = vpop.f32.mrf.mxu0
    %v2353 = vadd.f32 %v2340, %v2352
    %v2354 = vpop.f32.mrf.mxu0
    %2355 = vdwg.mxu0
    %2356 = vmatpush.bf16.msra.mxu0 %v1702
    %2357 = vmatpush.bf16.msra.mxu0 %v1695
    %2358 = vmatpush.bf16.msra.mxu0 %v1688
    %2359 = vmatpush.bf16.msra.mxu0 %v1681
    %2360 = vmatpush.bf16.msra.mxu0 %v1674
    %2361 = vmatpush.bf16.msra.mxu0 %v1667
    %2362 = vmatpush.bf16.msra.mxu0 %v1660
    %2363 = vmatpush.bf16.msra.mxu0 %v1653
    %2364 = vmatmul.bf16.gmra.mxu0 %v668
    %v2365 = vpop.f32.mrf.mxu0
    %v2366 = vadd.f32 %v935, %v2365
    %v2367 = vpop.f32.mrf.mxu0
    %2368 = vdwg.mxu0
    %2369 = vmatpush.bf16.msra.mxu0 %v1758
    %2370 = vmatpush.bf16.msra.mxu0 %v1751
    %2371 = vmatpush.bf16.msra.mxu0 %v1744
    %2372 = vmatpush.bf16.msra.mxu0 %v1737
    %2373 = vmatpush.bf16.msra.mxu0 %v1730
    %2374 = vmatpush.bf16.msra.mxu0 %v1723
    %2375 = vmatpush.bf16.msra.mxu0 %v1716
    %2376 = vmatpush.bf16.msra.mxu0 %v1709
    %2377 = vmatmul.bf16.gmra.mxu0 %v669
    %v2378 = vpop.f32.mrf.mxu0
    %v2379 = vadd.f32 %v2366, %v2378
    %v2380 = vpop.f32.mrf.mxu0
    %2381 = vdwg.mxu0
    %2382 = vmatpush.bf16.msra.mxu0 %v1814
    %2383 = vmatpush.bf16.msra.mxu0 %v1807
    %2384 = vmatpush.bf16.msra.mxu0 %v1800
    %2385 = vmatpush.bf16.msra.mxu0 %v1793
    %2386 = vmatpush.bf16.msra.mxu0 %v1786
    %2387 = vmatpush.bf16.msra.mxu0 %v1779
    %2388 = vmatpush.bf16.msra.mxu0 %v1772
    %2389 = vmatpush.bf16.msra.mxu0 %v1765
    %2390 = vmatmul.bf16.gmra.mxu0 %v670
    %v2391 = vpop.f32.mrf.mxu0
    %v2392 = vadd.f32 %v2379, %v2391
    %v2393 = vpop.f32.mrf.mxu0
    %2394 = vdwg.mxu0
    %2395 = vmatpush.bf16.msra.mxu0 %v1870
    %2396 = vmatpush.bf16.msra.mxu0 %v1863
    %2397 = vmatpush.bf16.msra.mxu0 %v1856
    %2398 = vmatpush.bf16.msra.mxu0 %v1849
    %2399 = vmatpush.bf16.msra.mxu0 %v1842
    %2400 = vmatpush.bf16.msra.mxu0 %v1835
    %2401 = vmatpush.bf16.msra.mxu0 %v1828
    %2402 = vmatpush.bf16.msra.mxu0 %v1821
    %2403 = vmatmul.bf16.gmra.mxu0 %v671
    %v2404 = vpop.f32.mrf.mxu0
    %v2405 = vadd.f32 %v2392, %v2404
    %v2406 = vpop.f32.mrf.mxu0
    %2407 = vdwg.mxu0
    %2408 = vmatpush.bf16.msra.mxu0 %v1703
    %2409 = vmatpush.bf16.msra.mxu0 %v1696
    %2410 = vmatpush.bf16.msra.mxu0 %v1689
    %2411 = vmatpush.bf16.msra.mxu0 %v1682
    %2412 = vmatpush.bf16.msra.mxu0 %v1675
    %2413 = vmatpush.bf16.msra.mxu0 %v1668
    %2414 = vmatpush.bf16.msra.mxu0 %v1661
    %2415 = vmatpush.bf16.msra.mxu0 %v1654
    %2416 = vmatmul.bf16.gmra.mxu0 %v668
    %v2417 = vpop.f32.mrf.mxu0
    %v2418 = vadd.f32 %v936, %v2417
    %v2419 = vpop.f32.mrf.mxu0
    %2420 = vdwg.mxu0
    %2421 = vmatpush.bf16.msra.mxu0 %v1759
    %2422 = vmatpush.bf16.msra.mxu0 %v1752
    %2423 = vmatpush.bf16.msra.mxu0 %v1745
    %2424 = vmatpush.bf16.msra.mxu0 %v1738
    %2425 = vmatpush.bf16.msra.mxu0 %v1731
    %2426 = vmatpush.bf16.msra.mxu0 %v1724
    %2427 = vmatpush.bf16.msra.mxu0 %v1717
    %2428 = vmatpush.bf16.msra.mxu0 %v1710
    %2429 = vmatmul.bf16.gmra.mxu0 %v669
    %v2430 = vpop.f32.mrf.mxu0
    %v2431 = vadd.f32 %v2418, %v2430
    %v2432 = vpop.f32.mrf.mxu0
    %2433 = vdwg.mxu0
    %2434 = vmatpush.bf16.msra.mxu0 %v1815
    %2435 = vmatpush.bf16.msra.mxu0 %v1808
    %2436 = vmatpush.bf16.msra.mxu0 %v1801
    %2437 = vmatpush.bf16.msra.mxu0 %v1794
    %2438 = vmatpush.bf16.msra.mxu0 %v1787
    %2439 = vmatpush.bf16.msra.mxu0 %v1780
    %2440 = vmatpush.bf16.msra.mxu0 %v1773
    %2441 = vmatpush.bf16.msra.mxu0 %v1766
    %2442 = vmatmul.bf16.gmra.mxu0 %v670
    %v2443 = vpop.f32.mrf.mxu0
    %v2444 = vadd.f32 %v2431, %v2443
    %v2445 = vpop.f32.mrf.mxu0
    %2446 = vdwg.mxu0
    %2447 = vmatpush.bf16.msra.mxu0 %v1871
    %2448 = vmatpush.bf16.msra.mxu0 %v1864
    %2449 = vmatpush.bf16.msra.mxu0 %v1857
    %2450 = vmatpush.bf16.msra.mxu0 %v1850
    %2451 = vmatpush.bf16.msra.mxu0 %v1843
    %2452 = vmatpush.bf16.msra.mxu0 %v1836
    %2453 = vmatpush.bf16.msra.mxu0 %v1829
    %2454 = vmatpush.bf16.msra.mxu0 %v1822
    %2455 = vmatmul.bf16.gmra.mxu0 %v671
    %v2456 = vpop.f32.mrf.mxu0
    %v2457 = vadd.f32 %v2444, %v2456
    %v2458 = vpop.f32.mrf.mxu0
    %2459 = vdwg.mxu0
    %v2460 = vtanh.pop %v2145
    %v2461 = vtanh.pop %v2197
    %v2462 = vtanh.pop %v2249
    %v2463 = vtanh.pop %v2301
    %v2464 = vtanh.pop %v2353
    %v2465 = vtanh.pop %v2405
    %v2466 = vtanh.pop %v2457
    %2467 = vst [vmem:[#allocation2] sm:$0xff] %v2460
    %2468 = vst [vmem:[#allocation2 + $0x8] sm:$0xff] %v2461
    %2469 = vst [vmem:[#allocation2 + $0x10] sm:$0xff] %v2462
    %2470 = vst [vmem:[#allocation2 + $0x18] sm:$0xff] %v2463
    %2471 = vst [vmem:[#allocation2 + $0x20] sm:$0xff] %v2464
    %2472 = vst [vmem:[#allocation2 + $0x28] sm:$0xff] %v2465
    %vm2473 = vcmask 130048
    %2474 = vst.msk [vmem:[#allocation2 + $0x30] sm:$0xff] %vm2473, %v2466
    // Predicated region
    $region30: #{tpu_custom_call.1} parent=1 // pred_check
      _
    $region31: #{tpu_custom_call.1} parent=1 // pred_check_branch
      %2476 = sbr.rel (0) target = $region33
    $region32: #{tpu_custom_call.1} parent=1 // pred_region
      %2478 = vsyncadd [#allocation3], 0
      %s2480 = sshll.u32 [#allocation2], 4
      %s2481 = int_to_ptr.vmem [resolvable:$true] %s2480
      %s2482 = sshll.u32 %s7, 4
      %s2483 = int_to_ptr.hbm [resolvable:$true] %s2482
      %2485 = dma.vmem_to_hbm [thread:$0]  %s2481, 896, %s2483, [#allocation3]
    $region33: #{tpu_custom_call.1} parent=1 // pred_fallthru
      _
    // Predicated region
    $region34: #{tpu_custom_call.1} parent=1 // pred_check
      _
    $region35: #{tpu_custom_call.1} parent=1 // pred_check_branch
      %2487 = sbr.rel (0) target = $region37
    $region36: #{tpu_custom_call.1} parent=1 // pred_region
      %2489 = dma.done [#allocation3], 896
    $region37: #{tpu_custom_call.1} parent=1 // pred_fallthru
      _
    %2490 = vsyncpa [#allocation3], 1

</llo_original>
